<compile_context>
chip_gen: v5e
topology: v5e:2x2
jax: 0.10.0
libtpu: 0.0.40
codegen_flags: <defaults>
</compile_context>

<pallas_src>
import math

import jax
import jax.numpy as jnp
from jax.experimental import pallas as pl
from jax.experimental.pallas import tpu as pltpu

# Small synthetic model dimensions.
B = 2            # batch
S = 8            # sequence length
H = 32           # hidden size
NH = 4           # attention heads
DH = H // NH     # head dim
F = 64           # FFN intermediate size
VOCAB = 64
NUM_LABELS = 2
NUM_LAYERS = 2
LN_EPS = 1e-12
LANE = 128       # lane-padded width for consolidated vector refs


# ---------------------------------------------------------------------------
# In-kernel helpers
# ---------------------------------------------------------------------------
def _ln(v, g, b):
    mu = jnp.mean(v, axis=-1, keepdims=True)
    var = jnp.mean((v - mu) ** 2, axis=-1, keepdims=True)
    return (v - mu) * jax.lax.rsqrt(var + LN_EPS) * g + b


# ---------------------------------------------------------------------------
# Fused forward kernel (single invocation, no grid, no scratch)
# ---------------------------------------------------------------------------
# Per-layer consolidated vector block vecs_ref: (L, 8, 128) f32, rows:
#   0: bqkv (3H=96 valid, Q third pre-scaled)   1: bo   2: b2
#   3: ln1_g  4: ln1_b  5: ln2_g  6: ln2_b      7: b1 (F=64 valid)
# Global vector block gvecs_ref: (4, 128) f32, rows:
#   0: ln_emb_g  1: ln_emb_b  2: bp  3: bc (NUM_LABELS valid)
def _fused_forward_kernel(x_emb_ref, mask_ref,
                          wqkv_ref, wo_ref, w1_ref, w2_ref,
                          vecs_ref, gvecs_ref, wpc_ref,
                          out_ref):
    gv = gvecs_ref[...]                                   # (4, 128) f32
    # Embedding LayerNorm.  x stays (B*S, H) f32 for the whole forward.
    x = _ln(x_emb_ref[...], gv[0:1, :H], gv[1:2, :H])

    # Additive key-padding bias, broadcast ONCE to the full score shape.
    neg = (1.0 - mask_ref[...]) * (-1e9)                  # (B, S)
    neg_full = jnp.broadcast_to(neg[:, None, :], (B, S, S))

    for l in range(NUM_LAYERS):                           # static unroll (L=2)
        wqkv = wqkv_ref[l]                                # (H, 3H) bf16, Q-scaled
        wo = wo_ref[l]                                    # (H, H)  bf16
        w1 = w1_ref[l]                                    # (H, F)  bf16
        w2 = w2_ref[l]                                    # (F, H)  bf16
        vecs = vecs_ref[l]                                # (8, 128) f32
        bqkv = vecs[0:1, :3 * H]
        bo = vecs[1:2, :H]
        b2 = vecs[2:3, :H]
        ln1_g, ln1_b = vecs[3:4, :H], vecs[4:5, :H]
        ln2_g, ln2_b = vecs[5:6, :H], vecs[6:7, :H]
        b1 = vecs[7:8, :F]

        # Fused QKV: one (B*S,H)x(H,3H) bf16 MXU matmul + one bias add.
        qkv = jnp.dot(x.astype(jnp.bfloat16), wqkv,
                      preferred_element_type=jnp.float32) + bqkv   # (B*S, 3H)
        q3b = qkv[:, 0:H].reshape(B, S, H).astype(jnp.bfloat16)
        k3b = qkv[:, H:2 * H].reshape(B, S, H).astype(jnp.bfloat16)
        v3b = qkv[:, 2 * H:3 * H].reshape(B, S, H).astype(jnp.bfloat16)

        # Per-head attention (static unroll, NH=4); contexts stay in registers.
        ctx_heads = []
        for hd in range(NH):
            sl = slice(hd * DH, (hd + 1) * DH)
            s = jnp.einsum('bqd,bkd->bqk', q3b[:, :, sl], k3b[:, :, sl],
                           preferred_element_type=jnp.float32) + neg_full
            s = s - jnp.max(s, axis=-1, keepdims=True)
            p = jnp.exp(s)
            p = p * pl.reciprocal(jnp.sum(p, axis=-1, keepdims=True),
                                  approx=True)
            ctx_heads.append(
                jnp.einsum('bqk,bkd->bqd', p.astype(jnp.bfloat16),
                           v3b[:, :, sl],
                           preferred_element_type=jnp.float32))    # (B,S,DH)

        # Single output projection over all heads (no VMEM scratch).
        ctx = jnp.concatenate(ctx_heads, axis=-1).reshape(B * S, H)
        attn = jnp.dot(ctx.astype(jnp.bfloat16), wo,
                       preferred_element_type=jnp.float32) + bo
        h1 = _ln(x + attn, ln1_g, ln1_b)

        # FFN.
        ff = jnp.dot(h1.astype(jnp.bfloat16), w1,
                     preferred_element_type=jnp.float32) + b1
        # TODO(synk): HF RoBERTa uses exact erf GELU; tanh approximation kept
        # here (EUP-friendly) — tiny numerical difference vs the HF reference.
        ff = jax.nn.gelu(ff, approximate=True)
        ff = jnp.dot(ff.astype(jnp.bfloat16), w2,
                     preferred_element_type=jnp.float32) + b2
        x = _ln(h1 + ff, ln2_g, ln2_b)

    # Batched CLS pooler (tanh) + classifier: one (B,H) slab, two matmuls,
    # one store.  Logits == transformer(...)[0].
    cls = x.reshape(B, S, H)[:, 0:1, :].reshape(B, H)
    wpc = wpc_ref[...]                                    # (H, H+NUM_LABELS) bf16
    bp = gv[2:3, :H]
    bc = gv[3:4, :NUM_LABELS]
    pooled = jnp.tanh(
        jnp.dot(cls.astype(jnp.bfloat16), wpc[:, :H],
                preferred_element_type=jnp.float32) + bp)
    out_ref[...] = (
        jnp.dot(pooled.astype(jnp.bfloat16), wpc[:, H:H + NUM_LABELS],
                preferred_element_type=jnp.float32) + bc)


# ---------------------------------------------------------------------------
# Parameter init + packing
# ---------------------------------------------------------------------------
def init_params(key):
    keys = iter(jax.random.split(key, 32))

    def nrm(shape, scale=0.02):
        return (scale * jax.random.normal(next(keys), shape)).astype(jnp.float32)

    params = {
        "word_emb": nrm((VOCAB, H)),
        "pos_emb": nrm((S, H)),
        "ln_emb_g": jnp.ones((1, H), jnp.float32),
        "ln_emb_b": jnp.zeros((1, H), jnp.float32),
        "wp": nrm((H, H)), "bp": jnp.zeros((1, H), jnp.float32),
        "wc": nrm((H, NUM_LABELS)), "bc": jnp.zeros((1, NUM_LABELS), jnp.float32),
        "layers": [],
    }
    for _ in range(NUM_LAYERS):
        params["layers"].append({
            "wq": nrm((H, H)), "bq": jnp.zeros((1, H), jnp.float32),
            "wk": nrm((H, H)), "bk": jnp.zeros((1, H), jnp.float32),
            "wv": nrm((H, H)), "bv": jnp.zeros((1, H), jnp.float32),
            "wo": nrm((H, H)), "bo": jnp.zeros((1, H), jnp.float32),
            "ln1_g": jnp.ones((1, H), jnp.float32),
            "ln1_b": jnp.zeros((1, H), jnp.float32),
            "w1": nrm((H, F)), "b1": jnp.zeros((1, F), jnp.float32),
            "w2": nrm((F, H)), "b2": jnp.zeros((1, H), jnp.float32),
            "ln2_g": jnp.ones((1, H), jnp.float32),
            "ln2_b": jnp.zeros((1, H), jnp.float32),
        })
    return params


def _pad_row(v, width=LANE):
    v = v.reshape(1, -1)
    return jnp.pad(v, ((0, 0), (0, width - v.shape[1])))


def _pack_params(params):
    """Fuse QKV, stack per-layer weights (bf16), consolidate small vectors."""
    layers = params["layers"]
    scale = 1.0 / math.sqrt(DH)

    wqkv_all = jnp.stack([
        jnp.concatenate([lp["wq"] * scale, lp["wk"], lp["wv"]], axis=1)
        for lp in layers]).astype(jnp.bfloat16)                     # (L, H, 3H)
    wo_all = jnp.stack([lp["wo"] for lp in layers]).astype(jnp.bfloat16)
    w1_all = jnp.stack([lp["w1"] for lp in layers]).astype(jnp.bfloat16)
    w2_all = jnp.stack([lp["w2"] for lp in layers]).astype(jnp.bfloat16)

    vecs_all = jnp.stack([
        jnp.concatenate([
            _pad_row(jnp.concatenate(
                [lp["bq"] * scale, lp["bk"], lp["bv"]], axis=1)),   # 0: bqkv
            _pad_row(lp["bo"]),                                     # 1
            _pad_row(lp["b2"]),                                     # 2
            _pad_row(lp["ln1_g"]), _pad_row(lp["ln1_b"]),           # 3, 4
            _pad_row(lp["ln2_g"]), _pad_row(lp["ln2_b"]),           # 5, 6
            _pad_row(lp["b1"]),                                     # 7
        ], axis=0)
        for lp in layers])                                          # (L, 8, 128)

    gvecs = jnp.concatenate([
        _pad_row(params["ln_emb_g"]), _pad_row(params["ln_emb_b"]),
        _pad_row(params["bp"]), _pad_row(params["bc"])], axis=0)    # (4, 128)

    wpc = jnp.concatenate([params["wp"], params["wc"]],
                          axis=1).astype(jnp.bfloat16)              # (H, H+NL)

    return (wqkv_all, wo_all, w1_all, w2_all, vecs_all, gvecs, wpc)


# ---------------------------------------------------------------------------
# Full forward (== RobertuitoClasificator.forward(sent_id, mask))
# ---------------------------------------------------------------------------
@jax.jit
def robertuito_classificator_forward(sent_id, mask, params):
    # Embedding gather stays in plain JAX as glue; all dense math is in-kernel.
    emb = params["word_emb"][sent_id] + params["pos_emb"][None, :, :]
    x_emb = emb.reshape(B * S, H).astype(jnp.float32)
    mask2 = mask.astype(jnp.float32).reshape(B, S)

    inputs = (x_emb, mask2) + _pack_params(params)

    logits = pl.pallas_call(
        _fused_forward_kernel,
        out_shape=jax.ShapeDtypeStruct((B, NUM_LABELS), jnp.float32),
        in_specs=[pl.BlockSpec(memory_space=pltpu.MemorySpace.VMEM)
                  for _ in inputs],
        out_specs=pl.BlockSpec(memory_space=pltpu.MemorySpace.VMEM),
    )(*inputs)
    return logits


if __name__ == "__main__":
    key = jax.random.PRNGKey(0)
    pkey, idkey = jax.random.split(key)
    params = init_params(pkey)

    sent_id = jax.random.randint(idkey, (B, S), 0, VOCAB, dtype=jnp.int32)
    mask = jnp.ones((B, S), jnp.float32).at[1, 6:].set(0.0)  # pad tail of 2nd seq

    logits = jax.block_until_ready(
        robertuito_classificator_forward(sent_id, mask, params))

    assert logits.shape == (B, NUM_LABELS), logits.shape
    assert bool(jnp.all(jnp.isfinite(logits)))
    print("KERNEL_OK")
</pallas_src>

<mosaic_0001>
module attributes {stable_mosaic.version = 11 : i64} {
  func.func @_fused_forward_kernel(%arg0: memref<16x32xf32, #tpu.memory_space<vmem>>, %arg1: memref<2x8xf32, #tpu.memory_space<vmem>>, %arg2: memref<2x32x96xbf16, #tpu.memory_space<vmem>>, %arg3: memref<2x32x32xbf16, #tpu.memory_space<vmem>>, %arg4: memref<2x32x64xbf16, #tpu.memory_space<vmem>>, %arg5: memref<2x64x32xbf16, #tpu.memory_space<vmem>>, %arg6: memref<2x8x128xf32, #tpu.memory_space<vmem>>, %arg7: memref<4x128xf32, #tpu.memory_space<vmem>>, %arg8: memref<32x34xbf16, #tpu.memory_space<vmem>>, %arg9: memref<2x2xf32, #tpu.memory_space<vmem>>) attributes {dimension_semantics = [], scalar_prefetch = 0 : i64, scratch_operands = 0 : i64, tpu.core_type = #tpu.core_type<tc>} {
    %c0 = arith.constant 0 : index
    %c0_0 = arith.constant 0 : index
    %0 = vector.load %arg7[%c0, %c0_0] : memref<4x128xf32, #tpu.memory_space<vmem>>, vector<4x128xf32>
    %c0_1 = arith.constant 0 : index
    %c0_2 = arith.constant 0 : index
    %1 = vector.load %arg0[%c0_1, %c0_2] : memref<16x32xf32, #tpu.memory_space<vmem>>, vector<16x32xf32>
    %2 = vector.extract_strided_slice %0 {offsets = [0, 0], sizes = [1, 32], strides = [1, 1]} : vector<4x128xf32> to vector<1x32xf32>
    %3 = vector.extract_strided_slice %0 {offsets = [1, 0], sizes = [1, 32], strides = [1, 1]} : vector<4x128xf32> to vector<1x32xf32>
    %cst = arith.constant dense<0.000000e+00> : vector<16xf32>
    %4 = vector.multi_reduction <add>, %1, %cst [1] : vector<16x32xf32> to vector<16xf32>
    %5 = vector.shape_cast %4 : vector<16xf32> to vector<16x1xf32>
    %cst_3 = arith.constant 3.200000e+01 : f32
    %6 = vector.broadcast %cst_3 : f32 to vector<16x1xf32>
    %7 = arith.divf %5, %6 : vector<16x1xf32>
    %8 = vector.broadcast %7 : vector<16x1xf32> to vector<16x32xf32>
    %9 = arith.subf %1, %8 : vector<16x32xf32>
    %10 = arith.mulf %9, %9 : vector<16x32xf32>
    %cst_4 = arith.constant dense<0.000000e+00> : vector<16xf32>
    %11 = vector.multi_reduction <add>, %10, %cst_4 [1] : vector<16x32xf32> to vector<16xf32>
    %12 = vector.shape_cast %11 : vector<16xf32> to vector<16x1xf32>
    %cst_5 = arith.constant 3.200000e+01 : f32
    %13 = vector.broadcast %cst_5 : f32 to vector<16x1xf32>
    %14 = arith.divf %12, %13 : vector<16x1xf32>
    %15 = vector.broadcast %7 : vector<16x1xf32> to vector<16x32xf32>
    %16 = arith.subf %1, %15 : vector<16x32xf32>
    %cst_6 = arith.constant 9.99999996E-13 : f32
    %17 = vector.broadcast %cst_6 : f32 to vector<16x1xf32>
    %18 = arith.addf %14, %17 : vector<16x1xf32>
    %19 = math.rsqrt %18 : vector<16x1xf32>
    %20 = vector.broadcast %19 : vector<16x1xf32> to vector<16x32xf32>
    %21 = arith.mulf %16, %20 : vector<16x32xf32>
    %22 = vector.broadcast %2 : vector<1x32xf32> to vector<16x32xf32>
    %23 = arith.mulf %21, %22 : vector<16x32xf32>
    %24 = vector.broadcast %3 : vector<1x32xf32> to vector<16x32xf32>
    %25 = arith.addf %23, %24 : vector<16x32xf32>
    %c0_7 = arith.constant 0 : index
    %c0_8 = arith.constant 0 : index
    %26 = vector.load %arg1[%c0_7, %c0_8] : memref<2x8xf32, #tpu.memory_space<vmem>>, vector<2x8xf32>
    %cst_9 = arith.constant 1.000000e+00 : f32
    %27 = vector.broadcast %cst_9 : f32 to vector<2x8xf32>
    %28 = arith.subf %27, %26 : vector<2x8xf32>
    %cst_10 = arith.constant -1.000000e+09 : f32
    %29 = vector.broadcast %cst_10 : f32 to vector<2x8xf32>
    %30 = arith.mulf %28, %29 : vector<2x8xf32>
    %31 = vector.shape_cast %30 : vector<2x8xf32> to vector<2x1x8xf32>
    %32 = vector.shape_cast %31 : vector<2x1x8xf32> to vector<2x1x8xf32>
    %33 = vector.broadcast %32 : vector<2x1x8xf32> to vector<2x8x8xf32>
    %c0_11 = arith.constant 0 : index
    %c0_12 = arith.constant 0 : index
    %c0_13 = arith.constant 0 : index
    %34 = vector.load %arg2[%c0_11, %c0_12, %c0_13] : memref<2x32x96xbf16, #tpu.memory_space<vmem>>, vector<1x32x96xbf16>
    %35 = vector.shape_cast %34 : vector<1x32x96xbf16> to vector<32x96xbf16>
    %c0_14 = arith.constant 0 : index
    %c0_15 = arith.constant 0 : index
    %c0_16 = arith.constant 0 : index
    %36 = vector.load %arg3[%c0_14, %c0_15, %c0_16] : memref<2x32x32xbf16, #tpu.memory_space<vmem>>, vector<1x32x32xbf16>
    %37 = vector.shape_cast %36 : vector<1x32x32xbf16> to vector<32x32xbf16>
    %c0_17 = arith.constant 0 : index
    %c0_18 = arith.constant 0 : index
    %c0_19 = arith.constant 0 : index
    %38 = vector.load %arg4[%c0_17, %c0_18, %c0_19] : memref<2x32x64xbf16, #tpu.memory_space<vmem>>, vector<1x32x64xbf16>
    %39 = vector.shape_cast %38 : vector<1x32x64xbf16> to vector<32x64xbf16>
    %c0_20 = arith.constant 0 : index
    %c0_21 = arith.constant 0 : index
    %c0_22 = arith.constant 0 : index
    %40 = vector.load %arg5[%c0_20, %c0_21, %c0_22] : memref<2x64x32xbf16, #tpu.memory_space<vmem>>, vector<1x64x32xbf16>
    %41 = vector.shape_cast %40 : vector<1x64x32xbf16> to vector<64x32xbf16>
    %c0_23 = arith.constant 0 : index
    %c0_24 = arith.constant 0 : index
    %c0_25 = arith.constant 0 : index
    %42 = vector.load %arg6[%c0_23, %c0_24, %c0_25] : memref<2x8x128xf32, #tpu.memory_space<vmem>>, vector<1x8x128xf32>
    %43 = vector.shape_cast %42 : vector<1x8x128xf32> to vector<8x128xf32>
    %44 = vector.extract_strided_slice %43 {offsets = [0, 0], sizes = [1, 96], strides = [1, 1]} : vector<8x128xf32> to vector<1x96xf32>
    %45 = vector.extract_strided_slice %43 {offsets = [1, 0], sizes = [1, 32], strides = [1, 1]} : vector<8x128xf32> to vector<1x32xf32>
    %46 = vector.extract_strided_slice %43 {offsets = [2, 0], sizes = [1, 32], strides = [1, 1]} : vector<8x128xf32> to vector<1x32xf32>
    %47 = vector.extract_strided_slice %43 {offsets = [3, 0], sizes = [1, 32], strides = [1, 1]} : vector<8x128xf32> to vector<1x32xf32>
    %48 = vector.extract_strided_slice %43 {offsets = [4, 0], sizes = [1, 32], strides = [1, 1]} : vector<8x128xf32> to vector<1x32xf32>
    %49 = vector.extract_strided_slice %43 {offsets = [5, 0], sizes = [1, 32], strides = [1, 1]} : vector<8x128xf32> to vector<1x32xf32>
    %50 = vector.extract_strided_slice %43 {offsets = [6, 0], sizes = [1, 32], strides = [1, 1]} : vector<8x128xf32> to vector<1x32xf32>
    %51 = vector.extract_strided_slice %43 {offsets = [7, 0], sizes = [1, 64], strides = [1, 1]} : vector<8x128xf32> to vector<1x64xf32>
    %52 = arith.truncf %25 : vector<16x32xf32> to vector<16x32xbf16>
    %cst_26 = arith.constant dense<0.000000e+00> : vector<16x96xf32>
    %53 = tpu.matmul %52, %35, %cst_26 {dimension_numbers = #tpu.dot_dimension_numbers<[1], [0], [0], [1], [0, 0, 1, 1], [], []>} : vector<16x32xbf16>, vector<32x96xbf16>, vector<16x96xf32> -> vector<16x96xf32>
    %54 = vector.broadcast %44 : vector<1x96xf32> to vector<16x96xf32>
    %55 = arith.addf %53, %54 : vector<16x96xf32>
    %56 = vector.extract_strided_slice %55 {offsets = [0, 0], sizes = [16, 32], strides = [1, 1]} : vector<16x96xf32> to vector<16x32xf32>
    %57 = vector.shape_cast %56 : vector<16x32xf32> to vector<2x8x32xf32>
    %58 = arith.truncf %57 : vector<2x8x32xf32> to vector<2x8x32xbf16>
    %59 = vector.extract_strided_slice %55 {offsets = [0, 32], sizes = [16, 32], strides = [1, 1]} : vector<16x96xf32> to vector<16x32xf32>
    %60 = vector.shape_cast %59 : vector<16x32xf32> to vector<2x8x32xf32>
    %61 = arith.truncf %60 : vector<2x8x32xf32> to vector<2x8x32xbf16>
    %62 = vector.extract_strided_slice %55 {offsets = [0, 64], sizes = [16, 32], strides = [1, 1]} : vector<16x96xf32> to vector<16x32xf32>
    %63 = vector.shape_cast %62 : vector<16x32xf32> to vector<2x8x32xf32>
    %64 = arith.truncf %63 : vector<2x8x32xf32> to vector<2x8x32xbf16>
    %65 = vector.extract_strided_slice %58 {offsets = [0, 0, 0], sizes = [2, 8, 8], strides = [1, 1, 1]} : vector<2x8x32xbf16> to vector<2x8x8xbf16>
    %66 = vector.extract_strided_slice %61 {offsets = [0, 0, 0], sizes = [2, 8, 8], strides = [1, 1, 1]} : vector<2x8x32xbf16> to vector<2x8x8xbf16>
    "tpu.trace_start"() <{level = 10 : i32, message = "bqd,bkd->bqk"}> : () -> ()
    %cst_27 = arith.constant dense<0.000000e+00> : vector<2x8x8xf32>
    %67 = tpu.matmul %65, %66, %cst_27 {dimension_numbers = #tpu.dot_dimension_numbers<[2], [2], [1], [1], [0, 0, 0, 1, 1, 1], [0], [0]>} : vector<2x8x8xbf16>, vector<2x8x8xbf16>, vector<2x8x8xf32> -> vector<2x8x8xf32>
    "tpu.trace_stop"() : () -> ()
    %68 = arith.addf %67, %33 : vector<2x8x8xf32>
    %cst_28 = arith.constant dense<0xFF800000> : vector<2x8xf32>
    %69 = vector.multi_reduction <maximumf>, %68, %cst_28 [2] : vector<2x8x8xf32> to vector<2x8xf32>
    %70 = vector.shape_cast %69 : vector<2x8xf32> to vector<2x8x1xf32>
    %71 = vector.broadcast %70 : vector<2x8x1xf32> to vector<2x8x8xf32>
    %72 = arith.subf %68, %71 : vector<2x8x8xf32>
    %73 = math.exp %72 : vector<2x8x8xf32>
    %cst_29 = arith.constant dense<0.000000e+00> : vector<2x8xf32>
    %74 = vector.multi_reduction <add>, %73, %cst_29 [2] : vector<2x8x8xf32> to vector<2x8xf32>
    %75 = vector.shape_cast %74 : vector<2x8xf32> to vector<2x8x1xf32>
    %76 = tpu.reciprocal %75 {approx = true} : vector<2x8x1xf32> -> vector<2x8x1xf32>
    %77 = vector.broadcast %76 : vector<2x8x1xf32> to vector<2x8x8xf32>
    %78 = arith.mulf %73, %77 : vector<2x8x8xf32>
    %79 = arith.truncf %78 : vector<2x8x8xf32> to vector<2x8x8xbf16>
    %80 = vector.extract_strided_slice %64 {offsets = [0, 0, 0], sizes = [2, 8, 8], strides = [1, 1, 1]} : vector<2x8x32xbf16> to vector<2x8x8xbf16>
    "tpu.trace_start"() <{level = 10 : i32, message = "bqk,bkd->bqd"}> : () -> ()
    %cst_30 = arith.constant dense<0.000000e+00> : vector<2x8x8xf32>
    %81 = tpu.matmul %79, %80, %cst_30 {dimension_numbers = #tpu.dot_dimension_numbers<[2], [1], [1], [2], [0, 0, 0, 1, 1, 2], [0], [0]>} : vector<2x8x8xbf16>, vector<2x8x8xbf16>, vector<2x8x8xf32> -> vector<2x8x8xf32>
    "tpu.trace_stop"() : () -> ()
    %82 = vector.extract_strided_slice %58 {offsets = [0, 0, 8], sizes = [2, 8, 8], strides = [1, 1, 1]} : vector<2x8x32xbf16> to vector<2x8x8xbf16>
    %83 = vector.extract_strided_slice %61 {offsets = [0, 0, 8], sizes = [2, 8, 8], strides = [1, 1, 1]} : vector<2x8x32xbf16> to vector<2x8x8xbf16>
    "tpu.trace_start"() <{level = 10 : i32, message = "bqd,bkd->bqk"}> : () -> ()
    %cst_31 = arith.constant dense<0.000000e+00> : vector<2x8x8xf32>
    %84 = tpu.matmul %82, %83, %cst_31 {dimension_numbers = #tpu.dot_dimension_numbers<[2], [2], [1], [1], [0, 0, 0, 1, 1, 1], [0], [0]>} : vector<2x8x8xbf16>, vector<2x8x8xbf16>, vector<2x8x8xf32> -> vector<2x8x8xf32>
    "tpu.trace_stop"() : () -> ()
    %85 = arith.addf %84, %33 : vector<2x8x8xf32>
    %cst_32 = arith.constant dense<0xFF800000> : vector<2x8xf32>
    %86 = vector.multi_reduction <maximumf>, %85, %cst_32 [2] : vector<2x8x8xf32> to vector<2x8xf32>
    %87 = vector.shape_cast %86 : vector<2x8xf32> to vector<2x8x1xf32>
    %88 = vector.broadcast %87 : vector<2x8x1xf32> to vector<2x8x8xf32>
    %89 = arith.subf %85, %88 : vector<2x8x8xf32>
    %90 = math.exp %89 : vector<2x8x8xf32>
    %cst_33 = arith.constant dense<0.000000e+00> : vector<2x8xf32>
    %91 = vector.multi_reduction <add>, %90, %cst_33 [2] : vector<2x8x8xf32> to vector<2x8xf32>
    %92 = vector.shape_cast %91 : vector<2x8xf32> to vector<2x8x1xf32>
    %93 = tpu.reciprocal %92 {approx = true} : vector<2x8x1xf32> -> vector<2x8x1xf32>
    %94 = vector.broadcast %93 : vector<2x8x1xf32> to vector<2x8x8xf32>
    %95 = arith.mulf %90, %94 : vector<2x8x8xf32>
    %96 = arith.truncf %95 : vector<2x8x8xf32> to vector<2x8x8xbf16>
    %97 = vector.extract_strided_slice %64 {offsets = [0, 0, 8], sizes = [2, 8, 8], strides = [1, 1, 1]} : vector<2x8x32xbf16> to vector<2x8x8xbf16>
    "tpu.trace_start"() <{level = 10 : i32, message = "bqk,bkd->bqd"}> : () -> ()
    %cst_34 = arith.constant dense<0.000000e+00> : vector<2x8x8xf32>
    %98 = tpu.matmul %96, %97, %cst_34 {dimension_numbers = #tpu.dot_dimension_numbers<[2], [1], [1], [2], [0, 0, 0, 1, 1, 2], [0], [0]>} : vector<2x8x8xbf16>, vector<2x8x8xbf16>, vector<2x8x8xf32> -> vector<2x8x8xf32>
    "tpu.trace_stop"() : () -> ()
    %99 = vector.extract_strided_slice %58 {offsets = [0, 0, 16], sizes = [2, 8, 8], strides = [1, 1, 1]} : vector<2x8x32xbf16> to vector<2x8x8xbf16>
    %100 = vector.extract_strided_slice %61 {offsets = [0, 0, 16], sizes = [2, 8, 8], strides = [1, 1, 1]} : vector<2x8x32xbf16> to vector<2x8x8xbf16>
    "tpu.trace_start"() <{level = 10 : i32, message = "bqd,bkd->bqk"}> : () -> ()
    %cst_35 = arith.constant dense<0.000000e+00> : vector<2x8x8xf32>
    %101 = tpu.matmul %99, %100, %cst_35 {dimension_numbers = #tpu.dot_dimension_numbers<[2], [2], [1], [1], [0, 0, 0, 1, 1, 1], [0], [0]>} : vector<2x8x8xbf16>, vector<2x8x8xbf16>, vector<2x8x8xf32> -> vector<2x8x8xf32>
    "tpu.trace_stop"() : () -> ()
    %102 = arith.addf %101, %33 : vector<2x8x8xf32>
    %cst_36 = arith.constant dense<0xFF800000> : vector<2x8xf32>
    %103 = vector.multi_reduction <maximumf>, %102, %cst_36 [2] : vector<2x8x8xf32> to vector<2x8xf32>
    %104 = vector.shape_cast %103 : vector<2x8xf32> to vector<2x8x1xf32>
    %105 = vector.broadcast %104 : vector<2x8x1xf32> to vector<2x8x8xf32>
    %106 = arith.subf %102, %105 : vector<2x8x8xf32>
    %107 = math.exp %106 : vector<2x8x8xf32>
    %cst_37 = arith.constant dense<0.000000e+00> : vector<2x8xf32>
    %108 = vector.multi_reduction <add>, %107, %cst_37 [2] : vector<2x8x8xf32> to vector<2x8xf32>
    %109 = vector.shape_cast %108 : vector<2x8xf32> to vector<2x8x1xf32>
    %110 = tpu.reciprocal %109 {approx = true} : vector<2x8x1xf32> -> vector<2x8x1xf32>
    %111 = vector.broadcast %110 : vector<2x8x1xf32> to vector<2x8x8xf32>
    %112 = arith.mulf %107, %111 : vector<2x8x8xf32>
    %113 = arith.truncf %112 : vector<2x8x8xf32> to vector<2x8x8xbf16>
    %114 = vector.extract_strided_slice %64 {offsets = [0, 0, 16], sizes = [2, 8, 8], strides = [1, 1, 1]} : vector<2x8x32xbf16> to vector<2x8x8xbf16>
    "tpu.trace_start"() <{level = 10 : i32, message = "bqk,bkd->bqd"}> : () -> ()
    %cst_38 = arith.constant dense<0.000000e+00> : vector<2x8x8xf32>
    %115 = tpu.matmul %113, %114, %cst_38 {dimension_numbers = #tpu.dot_dimension_numbers<[2], [1], [1], [2], [0, 0, 0, 1, 1, 2], [0], [0]>} : vector<2x8x8xbf16>, vector<2x8x8xbf16>, vector<2x8x8xf32> -> vector<2x8x8xf32>
    "tpu.trace_stop"() : () -> ()
    %116 = vector.extract_strided_slice %58 {offsets = [0, 0, 24], sizes = [2, 8, 8], strides = [1, 1, 1]} : vector<2x8x32xbf16> to vector<2x8x8xbf16>
    %117 = vector.extract_strided_slice %61 {offsets = [0, 0, 24], sizes = [2, 8, 8], strides = [1, 1, 1]} : vector<2x8x32xbf16> to vector<2x8x8xbf16>
    "tpu.trace_start"() <{level = 10 : i32, message = "bqd,bkd->bqk"}> : () -> ()
    %cst_39 = arith.constant dense<0.000000e+00> : vector<2x8x8xf32>
    %118 = tpu.matmul %116, %117, %cst_39 {dimension_numbers = #tpu.dot_dimension_numbers<[2], [2], [1], [1], [0, 0, 0, 1, 1, 1], [0], [0]>} : vector<2x8x8xbf16>, vector<2x8x8xbf16>, vector<2x8x8xf32> -> vector<2x8x8xf32>
    "tpu.trace_stop"() : () -> ()
    %119 = arith.addf %118, %33 : vector<2x8x8xf32>
    %cst_40 = arith.constant dense<0xFF800000> : vector<2x8xf32>
    %120 = vector.multi_reduction <maximumf>, %119, %cst_40 [2] : vector<2x8x8xf32> to vector<2x8xf32>
    %121 = vector.shape_cast %120 : vector<2x8xf32> to vector<2x8x1xf32>
    %122 = vector.broadcast %121 : vector<2x8x1xf32> to vector<2x8x8xf32>
    %123 = arith.subf %119, %122 : vector<2x8x8xf32>
    %124 = math.exp %123 : vector<2x8x8xf32>
    %cst_41 = arith.constant dense<0.000000e+00> : vector<2x8xf32>
    %125 = vector.multi_reduction <add>, %124, %cst_41 [2] : vector<2x8x8xf32> to vector<2x8xf32>
    %126 = vector.shape_cast %125 : vector<2x8xf32> to vector<2x8x1xf32>
    %127 = tpu.reciprocal %126 {approx = true} : vector<2x8x1xf32> -> vector<2x8x1xf32>
    %128 = vector.broadcast %127 : vector<2x8x1xf32> to vector<2x8x8xf32>
    %129 = arith.mulf %124, %128 : vector<2x8x8xf32>
    %130 = arith.truncf %129 : vector<2x8x8xf32> to vector<2x8x8xbf16>
    %131 = vector.extract_strided_slice %64 {offsets = [0, 0, 24], sizes = [2, 8, 8], strides = [1, 1, 1]} : vector<2x8x32xbf16> to vector<2x8x8xbf16>
    "tpu.trace_start"() <{level = 10 : i32, message = "bqk,bkd->bqd"}> : () -> ()
    %cst_42 = arith.constant dense<0.000000e+00> : vector<2x8x8xf32>
    %132 = tpu.matmul %130, %131, %cst_42 {dimension_numbers = #tpu.dot_dimension_numbers<[2], [1], [1], [2], [0, 0, 0, 1, 1, 2], [0], [0]>} : vector<2x8x8xbf16>, vector<2x8x8xbf16>, vector<2x8x8xf32> -> vector<2x8x8xf32>
    "tpu.trace_stop"() : () -> ()
    %133 = tpu.concatenate %81, %98, %115, %132 in 2 : vector<2x8x8xf32>, vector<2x8x8xf32>, vector<2x8x8xf32>, vector<2x8x8xf32> -> vector<2x8x32xf32>
    %134 = vector.shape_cast %133 : vector<2x8x32xf32> to vector<16x32xf32>
    %135 = arith.truncf %134 : vector<16x32xf32> to vector<16x32xbf16>
    %cst_43 = arith.constant dense<0.000000e+00> : vector<16x32xf32>
    %136 = tpu.matmul %135, %37, %cst_43 {dimension_numbers = #tpu.dot_dimension_numbers<[1], [0], [0], [1], [0, 0, 1, 1], [], []>} : vector<16x32xbf16>, vector<32x32xbf16>, vector<16x32xf32> -> vector<16x32xf32>
    %137 = vector.broadcast %45 : vector<1x32xf32> to vector<16x32xf32>
    %138 = arith.addf %136, %137 : vector<16x32xf32>
    %139 = arith.addf %25, %138 : vector<16x32xf32>
    %cst_44 = arith.constant dense<0.000000e+00> : vector<16xf32>
    %140 = vector.multi_reduction <add>, %139, %cst_44 [1] : vector<16x32xf32> to vector<16xf32>
    %141 = vector.shape_cast %140 : vector<16xf32> to vector<16x1xf32>
    %cst_45 = arith.constant 3.200000e+01 : f32
    %142 = vector.broadcast %cst_45 : f32 to vector<16x1xf32>
    %143 = arith.divf %141, %142 : vector<16x1xf32>
    %144 = vector.broadcast %143 : vector<16x1xf32> to vector<16x32xf32>
    %145 = arith.subf %139, %144 : vector<16x32xf32>
    %146 = arith.mulf %145, %145 : vector<16x32xf32>
    %cst_46 = arith.constant dense<0.000000e+00> : vector<16xf32>
    %147 = vector.multi_reduction <add>, %146, %cst_46 [1] : vector<16x32xf32> to vector<16xf32>
    %148 = vector.shape_cast %147 : vector<16xf32> to vector<16x1xf32>
    %cst_47 = arith.constant 3.200000e+01 : f32
    %149 = vector.broadcast %cst_47 : f32 to vector<16x1xf32>
    %150 = arith.divf %148, %149 : vector<16x1xf32>
    %151 = vector.broadcast %143 : vector<16x1xf32> to vector<16x32xf32>
    %152 = arith.subf %139, %151 : vector<16x32xf32>
    %cst_48 = arith.constant 9.99999996E-13 : f32
    %153 = vector.broadcast %cst_48 : f32 to vector<16x1xf32>
    %154 = arith.addf %150, %153 : vector<16x1xf32>
    %155 = math.rsqrt %154 : vector<16x1xf32>
    %156 = vector.broadcast %155 : vector<16x1xf32> to vector<16x32xf32>
    %157 = arith.mulf %152, %156 : vector<16x32xf32>
    %158 = vector.broadcast %47 : vector<1x32xf32> to vector<16x32xf32>
    %159 = arith.mulf %157, %158 : vector<16x32xf32>
    %160 = vector.broadcast %48 : vector<1x32xf32> to vector<16x32xf32>
    %161 = arith.addf %159, %160 : vector<16x32xf32>
    %162 = arith.truncf %161 : vector<16x32xf32> to vector<16x32xbf16>
    %cst_49 = arith.constant dense<0.000000e+00> : vector<16x64xf32>
    %163 = tpu.matmul %162, %39, %cst_49 {dimension_numbers = #tpu.dot_dimension_numbers<[1], [0], [0], [1], [0, 0, 1, 1], [], []>} : vector<16x32xbf16>, vector<32x64xbf16>, vector<16x64xf32> -> vector<16x64xf32>
    %164 = vector.broadcast %51 : vector<1x64xf32> to vector<16x64xf32>
    %165 = arith.addf %163, %164 : vector<16x64xf32>
    %166 = arith.mulf %165, %165 : vector<16x64xf32>
    %167 = arith.mulf %165, %166 : vector<16x64xf32>
    %cst_50 = arith.constant 4.471500e-02 : f32
    %168 = vector.broadcast %cst_50 : f32 to vector<16x64xf32>
    %169 = arith.mulf %168, %167 : vector<16x64xf32>
    %170 = arith.addf %165, %169 : vector<16x64xf32>
    %cst_51 = arith.constant 0.797884583 : f32
    %171 = vector.broadcast %cst_51 : f32 to vector<16x64xf32>
    %172 = arith.mulf %171, %170 : vector<16x64xf32>
    %173 = math.tanh %172 : vector<16x64xf32>
    %cst_52 = arith.constant 1.000000e+00 : f32
    %174 = vector.broadcast %cst_52 : f32 to vector<16x64xf32>
    %175 = arith.addf %174, %173 : vector<16x64xf32>
    %cst_53 = arith.constant 5.000000e-01 : f32
    %176 = vector.broadcast %cst_53 : f32 to vector<16x64xf32>
    %177 = arith.mulf %176, %175 : vector<16x64xf32>
    %178 = arith.mulf %165, %177 : vector<16x64xf32>
    %179 = arith.truncf %178 : vector<16x64xf32> to vector<16x64xbf16>
    %cst_54 = arith.constant dense<0.000000e+00> : vector<16x32xf32>
    %180 = tpu.matmul %179, %41, %cst_54 {dimension_numbers = #tpu.dot_dimension_numbers<[1], [0], [0], [1], [0, 0, 1, 1], [], []>} : vector<16x64xbf16>, vector<64x32xbf16>, vector<16x32xf32> -> vector<16x32xf32>
    %181 = vector.broadcast %46 : vector<1x32xf32> to vector<16x32xf32>
    %182 = arith.addf %180, %181 : vector<16x32xf32>
    %183 = arith.addf %161, %182 : vector<16x32xf32>
    %cst_55 = arith.constant dense<0.000000e+00> : vector<16xf32>
    %184 = vector.multi_reduction <add>, %183, %cst_55 [1] : vector<16x32xf32> to vector<16xf32>
    %185 = vector.shape_cast %184 : vector<16xf32> to vector<16x1xf32>
    %cst_56 = arith.constant 3.200000e+01 : f32
    %186 = vector.broadcast %cst_56 : f32 to vector<16x1xf32>
    %187 = arith.divf %185, %186 : vector<16x1xf32>
    %188 = vector.broadcast %187 : vector<16x1xf32> to vector<16x32xf32>
    %189 = arith.subf %183, %188 : vector<16x32xf32>
    %190 = arith.mulf %189, %189 : vector<16x32xf32>
    %cst_57 = arith.constant dense<0.000000e+00> : vector<16xf32>
    %191 = vector.multi_reduction <add>, %190, %cst_57 [1] : vector<16x32xf32> to vector<16xf32>
    %192 = vector.shape_cast %191 : vector<16xf32> to vector<16x1xf32>
    %cst_58 = arith.constant 3.200000e+01 : f32
    %193 = vector.broadcast %cst_58 : f32 to vector<16x1xf32>
    %194 = arith.divf %192, %193 : vector<16x1xf32>
    %195 = vector.broadcast %187 : vector<16x1xf32> to vector<16x32xf32>
    %196 = arith.subf %183, %195 : vector<16x32xf32>
    %cst_59 = arith.constant 9.99999996E-13 : f32
    %197 = vector.broadcast %cst_59 : f32 to vector<16x1xf32>
    %198 = arith.addf %194, %197 : vector<16x1xf32>
    %199 = math.rsqrt %198 : vector<16x1xf32>
    %200 = vector.broadcast %199 : vector<16x1xf32> to vector<16x32xf32>
    %201 = arith.mulf %196, %200 : vector<16x32xf32>
    %202 = vector.broadcast %49 : vector<1x32xf32> to vector<16x32xf32>
    %203 = arith.mulf %201, %202 : vector<16x32xf32>
    %204 = vector.broadcast %50 : vector<1x32xf32> to vector<16x32xf32>
    %205 = arith.addf %203, %204 : vector<16x32xf32>
    %c1 = arith.constant 1 : index
    %c0_60 = arith.constant 0 : index
    %c0_61 = arith.constant 0 : index
    %206 = vector.load %arg2[%c1, %c0_60, %c0_61] : memref<2x32x96xbf16, #tpu.memory_space<vmem>>, vector<1x32x96xbf16>
    %207 = vector.shape_cast %206 : vector<1x32x96xbf16> to vector<32x96xbf16>
    %c1_62 = arith.constant 1 : index
    %c0_63 = arith.constant 0 : index
    %c0_64 = arith.constant 0 : index
    %208 = vector.load %arg3[%c1_62, %c0_63, %c0_64] : memref<2x32x32xbf16, #tpu.memory_space<vmem>>, vector<1x32x32xbf16>
    %209 = vector.shape_cast %208 : vector<1x32x32xbf16> to vector<32x32xbf16>
    %c1_65 = arith.constant 1 : index
    %c0_66 = arith.constant 0 : index
    %c0_67 = arith.constant 0 : index
    %210 = vector.load %arg4[%c1_65, %c0_66, %c0_67] : memref<2x32x64xbf16, #tpu.memory_space<vmem>>, vector<1x32x64xbf16>
    %211 = vector.shape_cast %210 : vector<1x32x64xbf16> to vector<32x64xbf16>
    %c1_68 = arith.constant 1 : index
    %c0_69 = arith.constant 0 : index
    %c0_70 = arith.constant 0 : index
    %212 = vector.load %arg5[%c1_68, %c0_69, %c0_70] : memref<2x64x32xbf16, #tpu.memory_space<vmem>>, vector<1x64x32xbf16>
    %213 = vector.shape_cast %212 : vector<1x64x32xbf16> to vector<64x32xbf16>
    %c1_71 = arith.constant 1 : index
    %c0_72 = arith.constant 0 : index
    %c0_73 = arith.constant 0 : index
    %214 = vector.load %arg6[%c1_71, %c0_72, %c0_73] : memref<2x8x128xf32, #tpu.memory_space<vmem>>, vector<1x8x128xf32>
    %215 = vector.shape_cast %214 : vector<1x8x128xf32> to vector<8x128xf32>
    %216 = vector.extract_strided_slice %215 {offsets = [0, 0], sizes = [1, 96], strides = [1, 1]} : vector<8x128xf32> to vector<1x96xf32>
    %217 = vector.extract_strided_slice %215 {offsets = [1, 0], sizes = [1, 32], strides = [1, 1]} : vector<8x128xf32> to vector<1x32xf32>
    %218 = vector.extract_strided_slice %215 {offsets = [2, 0], sizes = [1, 32], strides = [1, 1]} : vector<8x128xf32> to vector<1x32xf32>
    %219 = vector.extract_strided_slice %215 {offsets = [3, 0], sizes = [1, 32], strides = [1, 1]} : vector<8x128xf32> to vector<1x32xf32>
    %220 = vector.extract_strided_slice %215 {offsets = [4, 0], sizes = [1, 32], strides = [1, 1]} : vector<8x128xf32> to vector<1x32xf32>
    %221 = vector.extract_strided_slice %215 {offsets = [5, 0], sizes = [1, 32], strides = [1, 1]} : vector<8x128xf32> to vector<1x32xf32>
    %222 = vector.extract_strided_slice %215 {offsets = [6, 0], sizes = [1, 32], strides = [1, 1]} : vector<8x128xf32> to vector<1x32xf32>
    %223 = vector.extract_strided_slice %215 {offsets = [7, 0], sizes = [1, 64], strides = [1, 1]} : vector<8x128xf32> to vector<1x64xf32>
    %224 = arith.truncf %205 : vector<16x32xf32> to vector<16x32xbf16>
    %cst_74 = arith.constant dense<0.000000e+00> : vector<16x96xf32>
    %225 = tpu.matmul %224, %207, %cst_74 {dimension_numbers = #tpu.dot_dimension_numbers<[1], [0], [0], [1], [0, 0, 1, 1], [], []>} : vector<16x32xbf16>, vector<32x96xbf16>, vector<16x96xf32> -> vector<16x96xf32>
    %226 = vector.broadcast %216 : vector<1x96xf32> to vector<16x96xf32>
    %227 = arith.addf %225, %226 : vector<16x96xf32>
    %228 = vector.extract_strided_slice %227 {offsets = [0, 0], sizes = [16, 32], strides = [1, 1]} : vector<16x96xf32> to vector<16x32xf32>
    %229 = vector.shape_cast %228 : vector<16x32xf32> to vector<2x8x32xf32>
    %230 = arith.truncf %229 : vector<2x8x32xf32> to vector<2x8x32xbf16>
    %231 = vector.extract_strided_slice %227 {offsets = [0, 32], sizes = [16, 32], strides = [1, 1]} : vector<16x96xf32> to vector<16x32xf32>
    %232 = vector.shape_cast %231 : vector<16x32xf32> to vector<2x8x32xf32>
    %233 = arith.truncf %232 : vector<2x8x32xf32> to vector<2x8x32xbf16>
    %234 = vector.extract_strided_slice %227 {offsets = [0, 64], sizes = [16, 32], strides = [1, 1]} : vector<16x96xf32> to vector<16x32xf32>
    %235 = vector.shape_cast %234 : vector<16x32xf32> to vector<2x8x32xf32>
    %236 = arith.truncf %235 : vector<2x8x32xf32> to vector<2x8x32xbf16>
    %237 = vector.extract_strided_slice %230 {offsets = [0, 0, 0], sizes = [2, 8, 8], strides = [1, 1, 1]} : vector<2x8x32xbf16> to vector<2x8x8xbf16>
    %238 = vector.extract_strided_slice %233 {offsets = [0, 0, 0], sizes = [2, 8, 8], strides = [1, 1, 1]} : vector<2x8x32xbf16> to vector<2x8x8xbf16>
    "tpu.trace_start"() <{level = 10 : i32, message = "bqd,bkd->bqk"}> : () -> ()
    %cst_75 = arith.constant dense<0.000000e+00> : vector<2x8x8xf32>
    %239 = tpu.matmul %237, %238, %cst_75 {dimension_numbers = #tpu.dot_dimension_numbers<[2], [2], [1], [1], [0, 0, 0, 1, 1, 1], [0], [0]>} : vector<2x8x8xbf16>, vector<2x8x8xbf16>, vector<2x8x8xf32> -> vector<2x8x8xf32>
    "tpu.trace_stop"() : () -> ()
    %240 = arith.addf %239, %33 : vector<2x8x8xf32>
    %cst_76 = arith.constant dense<0xFF800000> : vector<2x8xf32>
    %241 = vector.multi_reduction <maximumf>, %240, %cst_76 [2] : vector<2x8x8xf32> to vector<2x8xf32>
    %242 = vector.shape_cast %241 : vector<2x8xf32> to vector<2x8x1xf32>
    %243 = vector.broadcast %242 : vector<2x8x1xf32> to vector<2x8x8xf32>
    %244 = arith.subf %240, %243 : vector<2x8x8xf32>
    %245 = math.exp %244 : vector<2x8x8xf32>
    %cst_77 = arith.constant dense<0.000000e+00> : vector<2x8xf32>
    %246 = vector.multi_reduction <add>, %245, %cst_77 [2] : vector<2x8x8xf32> to vector<2x8xf32>
    %247 = vector.shape_cast %246 : vector<2x8xf32> to vector<2x8x1xf32>
    %248 = tpu.reciprocal %247 {approx = true} : vector<2x8x1xf32> -> vector<2x8x1xf32>
    %249 = vector.broadcast %248 : vector<2x8x1xf32> to vector<2x8x8xf32>
    %250 = arith.mulf %245, %249 : vector<2x8x8xf32>
    %251 = arith.truncf %250 : vector<2x8x8xf32> to vector<2x8x8xbf16>
    %252 = vector.extract_strided_slice %236 {offsets = [0, 0, 0], sizes = [2, 8, 8], strides = [1, 1, 1]} : vector<2x8x32xbf16> to vector<2x8x8xbf16>
    "tpu.trace_start"() <{level = 10 : i32, message = "bqk,bkd->bqd"}> : () -> ()
    %cst_78 = arith.constant dense<0.000000e+00> : vector<2x8x8xf32>
    %253 = tpu.matmul %251, %252, %cst_78 {dimension_numbers = #tpu.dot_dimension_numbers<[2], [1], [1], [2], [0, 0, 0, 1, 1, 2], [0], [0]>} : vector<2x8x8xbf16>, vector<2x8x8xbf16>, vector<2x8x8xf32> -> vector<2x8x8xf32>
    "tpu.trace_stop"() : () -> ()
    %254 = vector.extract_strided_slice %230 {offsets = [0, 0, 8], sizes = [2, 8, 8], strides = [1, 1, 1]} : vector<2x8x32xbf16> to vector<2x8x8xbf16>
    %255 = vector.extract_strided_slice %233 {offsets = [0, 0, 8], sizes = [2, 8, 8], strides = [1, 1, 1]} : vector<2x8x32xbf16> to vector<2x8x8xbf16>
    "tpu.trace_start"() <{level = 10 : i32, message = "bqd,bkd->bqk"}> : () -> ()
    %cst_79 = arith.constant dense<0.000000e+00> : vector<2x8x8xf32>
    %256 = tpu.matmul %254, %255, %cst_79 {dimension_numbers = #tpu.dot_dimension_numbers<[2], [2], [1], [1], [0, 0, 0, 1, 1, 1], [0], [0]>} : vector<2x8x8xbf16>, vector<2x8x8xbf16>, vector<2x8x8xf32> -> vector<2x8x8xf32>
    "tpu.trace_stop"() : () -> ()
    %257 = arith.addf %256, %33 : vector<2x8x8xf32>
    %cst_80 = arith.constant dense<0xFF800000> : vector<2x8xf32>
    %258 = vector.multi_reduction <maximumf>, %257, %cst_80 [2] : vector<2x8x8xf32> to vector<2x8xf32>
    %259 = vector.shape_cast %258 : vector<2x8xf32> to vector<2x8x1xf32>
    %260 = vector.broadcast %259 : vector<2x8x1xf32> to vector<2x8x8xf32>
    %261 = arith.subf %257, %260 : vector<2x8x8xf32>
    %262 = math.exp %261 : vector<2x8x8xf32>
    %cst_81 = arith.constant dense<0.000000e+00> : vector<2x8xf32>
    %263 = vector.multi_reduction <add>, %262, %cst_81 [2] : vector<2x8x8xf32> to vector<2x8xf32>
    %264 = vector.shape_cast %263 : vector<2x8xf32> to vector<2x8x1xf32>
    %265 = tpu.reciprocal %264 {approx = true} : vector<2x8x1xf32> -> vector<2x8x1xf32>
    %266 = vector.broadcast %265 : vector<2x8x1xf32> to vector<2x8x8xf32>
    %267 = arith.mulf %262, %266 : vector<2x8x8xf32>
    %268 = arith.truncf %267 : vector<2x8x8xf32> to vector<2x8x8xbf16>
    %269 = vector.extract_strided_slice %236 {offsets = [0, 0, 8], sizes = [2, 8, 8], strides = [1, 1, 1]} : vector<2x8x32xbf16> to vector<2x8x8xbf16>
    "tpu.trace_start"() <{level = 10 : i32, message = "bqk,bkd->bqd"}> : () -> ()
    %cst_82 = arith.constant dense<0.000000e+00> : vector<2x8x8xf32>
    %270 = tpu.matmul %268, %269, %cst_82 {dimension_numbers = #tpu.dot_dimension_numbers<[2], [1], [1], [2], [0, 0, 0, 1, 1, 2], [0], [0]>} : vector<2x8x8xbf16>, vector<2x8x8xbf16>, vector<2x8x8xf32> -> vector<2x8x8xf32>
    "tpu.trace_stop"() : () -> ()
    %271 = vector.extract_strided_slice %230 {offsets = [0, 0, 16], sizes = [2, 8, 8], strides = [1, 1, 1]} : vector<2x8x32xbf16> to vector<2x8x8xbf16>
    %272 = vector.extract_strided_slice %233 {offsets = [0, 0, 16], sizes = [2, 8, 8], strides = [1, 1, 1]} : vector<2x8x32xbf16> to vector<2x8x8xbf16>
    "tpu.trace_start"() <{level = 10 : i32, message = "bqd,bkd->bqk"}> : () -> ()
    %cst_83 = arith.constant dense<0.000000e+00> : vector<2x8x8xf32>
    %273 = tpu.matmul %271, %272, %cst_83 {dimension_numbers = #tpu.dot_dimension_numbers<[2], [2], [1], [1], [0, 0, 0, 1, 1, 1], [0], [0]>} : vector<2x8x8xbf16>, vector<2x8x8xbf16>, vector<2x8x8xf32> -> vector<2x8x8xf32>
    "tpu.trace_stop"() : () -> ()
    %274 = arith.addf %273, %33 : vector<2x8x8xf32>
    %cst_84 = arith.constant dense<0xFF800000> : vector<2x8xf32>
    %275 = vector.multi_reduction <maximumf>, %274, %cst_84 [2] : vector<2x8x8xf32> to vector<2x8xf32>
    %276 = vector.shape_cast %275 : vector<2x8xf32> to vector<2x8x1xf32>
    %277 = vector.broadcast %276 : vector<2x8x1xf32> to vector<2x8x8xf32>
    %278 = arith.subf %274, %277 : vector<2x8x8xf32>
    %279 = math.exp %278 : vector<2x8x8xf32>
    %cst_85 = arith.constant dense<0.000000e+00> : vector<2x8xf32>
    %280 = vector.multi_reduction <add>, %279, %cst_85 [2] : vector<2x8x8xf32> to vector<2x8xf32>
    %281 = vector.shape_cast %280 : vector<2x8xf32> to vector<2x8x1xf32>
    %282 = tpu.reciprocal %281 {approx = true} : vector<2x8x1xf32> -> vector<2x8x1xf32>
    %283 = vector.broadcast %282 : vector<2x8x1xf32> to vector<2x8x8xf32>
    %284 = arith.mulf %279, %283 : vector<2x8x8xf32>
    %285 = arith.truncf %284 : vector<2x8x8xf32> to vector<2x8x8xbf16>
    %286 = vector.extract_strided_slice %236 {offsets = [0, 0, 16], sizes = [2, 8, 8], strides = [1, 1, 1]} : vector<2x8x32xbf16> to vector<2x8x8xbf16>
    "tpu.trace_start"() <{level = 10 : i32, message = "bqk,bkd->bqd"}> : () -> ()
    %cst_86 = arith.constant dense<0.000000e+00> : vector<2x8x8xf32>
    %287 = tpu.matmul %285, %286, %cst_86 {dimension_numbers = #tpu.dot_dimension_numbers<[2], [1], [1], [2], [0, 0, 0, 1, 1, 2], [0], [0]>} : vector<2x8x8xbf16>, vector<2x8x8xbf16>, vector<2x8x8xf32> -> vector<2x8x8xf32>
    "tpu.trace_stop"() : () -> ()
    %288 = vector.extract_strided_slice %230 {offsets = [0, 0, 24], sizes = [2, 8, 8], strides = [1, 1, 1]} : vector<2x8x32xbf16> to vector<2x8x8xbf16>
    %289 = vector.extract_strided_slice %233 {offsets = [0, 0, 24], sizes = [2, 8, 8], strides = [1, 1, 1]} : vector<2x8x32xbf16> to vector<2x8x8xbf16>
    "tpu.trace_start"() <{level = 10 : i32, message = "bqd,bkd->bqk"}> : () -> ()
    %cst_87 = arith.constant dense<0.000000e+00> : vector<2x8x8xf32>
    %290 = tpu.matmul %288, %289, %cst_87 {dimension_numbers = #tpu.dot_dimension_numbers<[2], [2], [1], [1], [0, 0, 0, 1, 1, 1], [0], [0]>} : vector<2x8x8xbf16>, vector<2x8x8xbf16>, vector<2x8x8xf32> -> vector<2x8x8xf32>
    "tpu.trace_stop"() : () -> ()
    %291 = arith.addf %290, %33 : vector<2x8x8xf32>
    %cst_88 = arith.constant dense<0xFF800000> : vector<2x8xf32>
    %292 = vector.multi_reduction <maximumf>, %291, %cst_88 [2] : vector<2x8x8xf32> to vector<2x8xf32>
    %293 = vector.shape_cast %292 : vector<2x8xf32> to vector<2x8x1xf32>
    %294 = vector.broadcast %293 : vector<2x8x1xf32> to vector<2x8x8xf32>
    %295 = arith.subf %291, %294 : vector<2x8x8xf32>
    %296 = math.exp %295 : vector<2x8x8xf32>
    %cst_89 = arith.constant dense<0.000000e+00> : vector<2x8xf32>
    %297 = vector.multi_reduction <add>, %296, %cst_89 [2] : vector<2x8x8xf32> to vector<2x8xf32>
    %298 = vector.shape_cast %297 : vector<2x8xf32> to vector<2x8x1xf32>
    %299 = tpu.reciprocal %298 {approx = true} : vector<2x8x1xf32> -> vector<2x8x1xf32>
    %300 = vector.broadcast %299 : vector<2x8x1xf32> to vector<2x8x8xf32>
    %301 = arith.mulf %296, %300 : vector<2x8x8xf32>
    %302 = arith.truncf %301 : vector<2x8x8xf32> to vector<2x8x8xbf16>
    %303 = vector.extract_strided_slice %236 {offsets = [0, 0, 24], sizes = [2, 8, 8], strides = [1, 1, 1]} : vector<2x8x32xbf16> to vector<2x8x8xbf16>
    "tpu.trace_start"() <{level = 10 : i32, message = "bqk,bkd->bqd"}> : () -> ()
    %cst_90 = arith.constant dense<0.000000e+00> : vector<2x8x8xf32>
    %304 = tpu.matmul %302, %303, %cst_90 {dimension_numbers = #tpu.dot_dimension_numbers<[2], [1], [1], [2], [0, 0, 0, 1, 1, 2], [0], [0]>} : vector<2x8x8xbf16>, vector<2x8x8xbf16>, vector<2x8x8xf32> -> vector<2x8x8xf32>
    "tpu.trace_stop"() : () -> ()
    %305 = tpu.concatenate %253, %270, %287, %304 in 2 : vector<2x8x8xf32>, vector<2x8x8xf32>, vector<2x8x8xf32>, vector<2x8x8xf32> -> vector<2x8x32xf32>
    %306 = vector.shape_cast %305 : vector<2x8x32xf32> to vector<16x32xf32>
    %307 = arith.truncf %306 : vector<16x32xf32> to vector<16x32xbf16>
    %cst_91 = arith.constant dense<0.000000e+00> : vector<16x32xf32>
    %308 = tpu.matmul %307, %209, %cst_91 {dimension_numbers = #tpu.dot_dimension_numbers<[1], [0], [0], [1], [0, 0, 1, 1], [], []>} : vector<16x32xbf16>, vector<32x32xbf16>, vector<16x32xf32> -> vector<16x32xf32>
    %309 = vector.broadcast %217 : vector<1x32xf32> to vector<16x32xf32>
    %310 = arith.addf %308, %309 : vector<16x32xf32>
    %311 = arith.addf %205, %310 : vector<16x32xf32>
    %cst_92 = arith.constant dense<0.000000e+00> : vector<16xf32>
    %312 = vector.multi_reduction <add>, %311, %cst_92 [1] : vector<16x32xf32> to vector<16xf32>
    %313 = vector.shape_cast %312 : vector<16xf32> to vector<16x1xf32>
    %cst_93 = arith.constant 3.200000e+01 : f32
    %314 = vector.broadcast %cst_93 : f32 to vector<16x1xf32>
    %315 = arith.divf %313, %314 : vector<16x1xf32>
    %316 = vector.broadcast %315 : vector<16x1xf32> to vector<16x32xf32>
    %317 = arith.subf %311, %316 : vector<16x32xf32>
    %318 = arith.mulf %317, %317 : vector<16x32xf32>
    %cst_94 = arith.constant dense<0.000000e+00> : vector<16xf32>
    %319 = vector.multi_reduction <add>, %318, %cst_94 [1] : vector<16x32xf32> to vector<16xf32>
    %320 = vector.shape_cast %319 : vector<16xf32> to vector<16x1xf32>
    %cst_95 = arith.constant 3.200000e+01 : f32
    %321 = vector.broadcast %cst_95 : f32 to vector<16x1xf32>
    %322 = arith.divf %320, %321 : vector<16x1xf32>
    %323 = vector.broadcast %315 : vector<16x1xf32> to vector<16x32xf32>
    %324 = arith.subf %311, %323 : vector<16x32xf32>
    %cst_96 = arith.constant 9.99999996E-13 : f32
    %325 = vector.broadcast %cst_96 : f32 to vector<16x1xf32>
    %326 = arith.addf %322, %325 : vector<16x1xf32>
    %327 = math.rsqrt %326 : vector<16x1xf32>
    %328 = vector.broadcast %327 : vector<16x1xf32> to vector<16x32xf32>
    %329 = arith.mulf %324, %328 : vector<16x32xf32>
    %330 = vector.broadcast %219 : vector<1x32xf32> to vector<16x32xf32>
    %331 = arith.mulf %329, %330 : vector<16x32xf32>
    %332 = vector.broadcast %220 : vector<1x32xf32> to vector<16x32xf32>
    %333 = arith.addf %331, %332 : vector<16x32xf32>
    %334 = arith.truncf %333 : vector<16x32xf32> to vector<16x32xbf16>
    %cst_97 = arith.constant dense<0.000000e+00> : vector<16x64xf32>
    %335 = tpu.matmul %334, %211, %cst_97 {dimension_numbers = #tpu.dot_dimension_numbers<[1], [0], [0], [1], [0, 0, 1, 1], [], []>} : vector<16x32xbf16>, vector<32x64xbf16>, vector<16x64xf32> -> vector<16x64xf32>
    %336 = vector.broadcast %223 : vector<1x64xf32> to vector<16x64xf32>
    %337 = arith.addf %335, %336 : vector<16x64xf32>
    %338 = arith.mulf %337, %337 : vector<16x64xf32>
    %339 = arith.mulf %337, %338 : vector<16x64xf32>
    %cst_98 = arith.constant 4.471500e-02 : f32
    %340 = vector.broadcast %cst_98 : f32 to vector<16x64xf32>
    %341 = arith.mulf %340, %339 : vector<16x64xf32>
    %342 = arith.addf %337, %341 : vector<16x64xf32>
    %cst_99 = arith.constant 0.797884583 : f32
    %343 = vector.broadcast %cst_99 : f32 to vector<16x64xf32>
    %344 = arith.mulf %343, %342 : vector<16x64xf32>
    %345 = math.tanh %344 : vector<16x64xf32>
    %cst_100 = arith.constant 1.000000e+00 : f32
    %346 = vector.broadcast %cst_100 : f32 to vector<16x64xf32>
    %347 = arith.addf %346, %345 : vector<16x64xf32>
    %cst_101 = arith.constant 5.000000e-01 : f32
    %348 = vector.broadcast %cst_101 : f32 to vector<16x64xf32>
    %349 = arith.mulf %348, %347 : vector<16x64xf32>
    %350 = arith.mulf %337, %349 : vector<16x64xf32>
    %351 = arith.truncf %350 : vector<16x64xf32> to vector<16x64xbf16>
    %cst_102 = arith.constant dense<0.000000e+00> : vector<16x32xf32>
    %352 = tpu.matmul %351, %213, %cst_102 {dimension_numbers = #tpu.dot_dimension_numbers<[1], [0], [0], [1], [0, 0, 1, 1], [], []>} : vector<16x64xbf16>, vector<64x32xbf16>, vector<16x32xf32> -> vector<16x32xf32>
    %353 = vector.broadcast %218 : vector<1x32xf32> to vector<16x32xf32>
    %354 = arith.addf %352, %353 : vector<16x32xf32>
    %355 = arith.addf %333, %354 : vector<16x32xf32>
    %cst_103 = arith.constant dense<0.000000e+00> : vector<16xf32>
    %356 = vector.multi_reduction <add>, %355, %cst_103 [1] : vector<16x32xf32> to vector<16xf32>
    %357 = vector.shape_cast %356 : vector<16xf32> to vector<16x1xf32>
    %cst_104 = arith.constant 3.200000e+01 : f32
    %358 = vector.broadcast %cst_104 : f32 to vector<16x1xf32>
    %359 = arith.divf %357, %358 : vector<16x1xf32>
    %360 = vector.broadcast %359 : vector<16x1xf32> to vector<16x32xf32>
    %361 = arith.subf %355, %360 : vector<16x32xf32>
    %362 = arith.mulf %361, %361 : vector<16x32xf32>
    %cst_105 = arith.constant dense<0.000000e+00> : vector<16xf32>
    %363 = vector.multi_reduction <add>, %362, %cst_105 [1] : vector<16x32xf32> to vector<16xf32>
    %364 = vector.shape_cast %363 : vector<16xf32> to vector<16x1xf32>
    %cst_106 = arith.constant 3.200000e+01 : f32
    %365 = vector.broadcast %cst_106 : f32 to vector<16x1xf32>
    %366 = arith.divf %364, %365 : vector<16x1xf32>
    %367 = vector.broadcast %359 : vector<16x1xf32> to vector<16x32xf32>
    %368 = arith.subf %355, %367 : vector<16x32xf32>
    %cst_107 = arith.constant 9.99999996E-13 : f32
    %369 = vector.broadcast %cst_107 : f32 to vector<16x1xf32>
    %370 = arith.addf %366, %369 : vector<16x1xf32>
    %371 = math.rsqrt %370 : vector<16x1xf32>
    %372 = vector.broadcast %371 : vector<16x1xf32> to vector<16x32xf32>
    %373 = arith.mulf %368, %372 : vector<16x32xf32>
    %374 = vector.broadcast %221 : vector<1x32xf32> to vector<16x32xf32>
    %375 = arith.mulf %373, %374 : vector<16x32xf32>
    %376 = vector.broadcast %222 : vector<1x32xf32> to vector<16x32xf32>
    %377 = arith.addf %375, %376 : vector<16x32xf32>
    %378 = vector.shape_cast %377 : vector<16x32xf32> to vector<2x8x32xf32>
    %379 = vector.extract_strided_slice %378 {offsets = [0, 0, 0], sizes = [2, 1, 32], strides = [1, 1, 1]} : vector<2x8x32xf32> to vector<2x1x32xf32>
    %380 = vector.shape_cast %379 : vector<2x1x32xf32> to vector<2x32xf32>
    %c0_108 = arith.constant 0 : index
    %c0_109 = arith.constant 0 : index
    %381 = vector.load %arg8[%c0_108, %c0_109] : memref<32x34xbf16, #tpu.memory_space<vmem>>, vector<32x34xbf16>
    %382 = vector.extract_strided_slice %0 {offsets = [2, 0], sizes = [1, 32], strides = [1, 1]} : vector<4x128xf32> to vector<1x32xf32>
    %383 = vector.extract_strided_slice %0 {offsets = [3, 0], sizes = [1, 2], strides = [1, 1]} : vector<4x128xf32> to vector<1x2xf32>
    %384 = arith.truncf %380 : vector<2x32xf32> to vector<2x32xbf16>
    %385 = vector.extract_strided_slice %381 {offsets = [0, 0], sizes = [32, 32], strides = [1, 1]} : vector<32x34xbf16> to vector<32x32xbf16>
    %cst_110 = arith.constant dense<0.000000e+00> : vector<2x32xf32>
    %386 = tpu.matmul %384, %385, %cst_110 {dimension_numbers = #tpu.dot_dimension_numbers<[1], [0], [0], [1], [0, 0, 1, 1], [], []>} : vector<2x32xbf16>, vector<32x32xbf16>, vector<2x32xf32> -> vector<2x32xf32>
    %387 = vector.broadcast %382 : vector<1x32xf32> to vector<2x32xf32>
    %388 = arith.addf %386, %387 : vector<2x32xf32>
    %389 = math.tanh %388 : vector<2x32xf32>
    %390 = arith.truncf %389 : vector<2x32xf32> to vector<2x32xbf16>
    %391 = vector.extract_strided_slice %381 {offsets = [0, 32], sizes = [32, 2], strides = [1, 1]} : vector<32x34xbf16> to vector<32x2xbf16>
    %cst_111 = arith.constant dense<0.000000e+00> : vector<2x2xf32>
    %392 = tpu.matmul %390, %391, %cst_111 {dimension_numbers = #tpu.dot_dimension_numbers<[1], [0], [0], [1], [0, 0, 1, 1], [], []>} : vector<2x32xbf16>, vector<32x2xbf16>, vector<2x2xf32> -> vector<2x2xf32>
    %393 = vector.broadcast %383 : vector<1x2xf32> to vector<2x2xf32>
    %394 = arith.addf %392, %393 : vector<2x2xf32>
    %c0_112 = arith.constant 0 : index
    %c0_113 = arith.constant 0 : index
    %395 = vector.load %arg9[%c0_112, %c0_113] : memref<2x2xf32, #tpu.memory_space<vmem>>, vector<2x2xf32>
    tpu.vector_store %arg9[%c0_112, %c0_113], %394 {strides = array<i32>} : memref<2x2xf32, #tpu.memory_space<vmem>>, vector<2x2xf32>,
    return
  }
}

</mosaic_0001>

<llo_original>
// kernel: robertuito_classificator_forward.1
$region0: #{robertuito_classificator_forward.1}
  #allocation0 [shape = 'u32[]', space=smem, size = 0x4, offset = 0x4, fixed_abs, tag = 'smem constant byte address 0x4 - core index']
  #allocation1 [shape = 'u32[72,128]{1,0:T(1,128)}', space=vmem, size = 0x9000, scoped, tag = 'internal scratch']
  %s0 = inlined_call_operand.vmem [shape: f32[16,32], index: 0, kind: input, shape index: {}]
  %s1 = inlined_call_operand.vmem [shape: f32[2,8], index: 1, kind: input, shape index: {}]
  %s2 = inlined_call_operand.vmem [shape: bf16[2,32,96], index: 2, kind: input, shape index: {}]
  %s3 = inlined_call_operand.vmem [shape: bf16[2,32,32], index: 3, kind: input, shape index: {}]
  %s4 = inlined_call_operand.vmem [shape: bf16[2,32,64], index: 4, kind: input, shape index: {}]
  %s5 = inlined_call_operand.vmem [shape: bf16[2,64,32], index: 5, kind: input, shape index: {}]
  %s6 = inlined_call_operand.vmem [shape: f32[2,8,128], index: 6, kind: input, shape index: {}]
  %s7 = inlined_call_operand.vmem [shape: f32[4,128], index: 7, kind: input, shape index: {}]
  %s8 = inlined_call_operand.vmem [shape: bf16[32,34], index: 8, kind: input, shape index: {}]
  %s9 = inlined_call_operand.hbm [shape: f32[2,2], index: 9, kind: output, shape index: {}]
  %s10 = sld [smem:[#allocation0]]
  $region46: #{robertuito_classificator_forward.1} parent=0
    _
  %s12 = ssub.s32 1, %s10
  %s13 = scalar_select 0, %s12, %s10
  $region1: #{robertuito_classificator_forward.1} parent=0
    #allocation2 [shape = 'u8[1024]{0}', space=vmem, size = 0x400, scoped, tag = 'output window, operand 0, single buffered']
    #allocation3 [shape = 's32[1]{0}', space=sflag, size = 0x4, scoped, tag = 'scoped memory for robertuito_classificator_forward.1']
    %14 = vsyncpa [#allocation3], 0
    // Predicated region
    $region2: #{robertuito_classificator_forward.1} parent=1 // pred_check
      _
    $region3: #{robertuito_classificator_forward.1} parent=1 // pred_check_branch
      %16 = sbr.rel (0) target = $region5
    $region4: #{robertuito_classificator_forward.1} parent=1 // pred_region
      _
    $region5: #{robertuito_classificator_forward.1} parent=1 // pred_fallthru
      _
    // Predicated region
    $region6: #{robertuito_classificator_forward.1} parent=1 // pred_check
      _
    $region7: #{robertuito_classificator_forward.1} parent=1 // pred_check_branch
      %18 = sbr.rel (0) target = $region9
    $region8: #{robertuito_classificator_forward.1} parent=1 // pred_region
      _
    $region9: #{robertuito_classificator_forward.1} parent=1 // pred_fallthru
      _
    // Predicated region
    $region10: #{robertuito_classificator_forward.1} parent=1 // pred_check
      _
    $region11: #{robertuito_classificator_forward.1} parent=1 // pred_check_branch
      %20 = sbr.rel (0) target = $region13
    $region12: #{robertuito_classificator_forward.1} parent=1 // pred_region
      _
    $region13: #{robertuito_classificator_forward.1} parent=1 // pred_fallthru
      _
    // Predicated region
    $region14: #{robertuito_classificator_forward.1} parent=1 // pred_check
      _
    $region15: #{robertuito_classificator_forward.1} parent=1 // pred_check_branch
      %22 = sbr.rel (0) target = $region17
    $region16: #{robertuito_classificator_forward.1} parent=1 // pred_region
      _
    $region17: #{robertuito_classificator_forward.1} parent=1 // pred_fallthru
      _
    // Predicated region
    $region18: #{robertuito_classificator_forward.1} parent=1 // pred_check
      _
    $region19: #{robertuito_classificator_forward.1} parent=1 // pred_check_branch
      %24 = sbr.rel (0) target = $region21
    $region20: #{robertuito_classificator_forward.1} parent=1 // pred_region
      _
    $region21: #{robertuito_classificator_forward.1} parent=1 // pred_fallthru
      _
    // Predicated region
    $region22: #{robertuito_classificator_forward.1} parent=1 // pred_check
      _
    $region23: #{robertuito_classificator_forward.1} parent=1 // pred_check_branch
      %26 = sbr.rel (0) target = $region25
    $region24: #{robertuito_classificator_forward.1} parent=1 // pred_region
      _
    $region25: #{robertuito_classificator_forward.1} parent=1 // pred_fallthru
      _
    // Predicated region
    $region26: #{robertuito_classificator_forward.1} parent=1 // pred_check
      _
    $region27: #{robertuito_classificator_forward.1} parent=1 // pred_check_branch
      %28 = sbr.rel (0) target = $region29
    $region28: #{robertuito_classificator_forward.1} parent=1 // pred_region
      _
    $region29: #{robertuito_classificator_forward.1} parent=1 // pred_fallthru
      _
    // Predicated region
    $region30: #{robertuito_classificator_forward.1} parent=1 // pred_check
      _
    $region31: #{robertuito_classificator_forward.1} parent=1 // pred_check_branch
      %30 = sbr.rel (0) target = $region33
    $region32: #{robertuito_classificator_forward.1} parent=1 // pred_region
      _
    $region33: #{robertuito_classificator_forward.1} parent=1 // pred_fallthru
      _
    // Predicated region
    $region34: #{robertuito_classificator_forward.1} parent=1 // pred_check
      _
    $region35: #{robertuito_classificator_forward.1} parent=1 // pred_check_branch
      %32 = sbr.rel (0) target = $region37
    $region36: #{robertuito_classificator_forward.1} parent=1 // pred_region
      _
    $region37: #{robertuito_classificator_forward.1} parent=1 // pred_fallthru
      _
    %v34 = vld [vmem:[%s7] sm:$0xf]
    %v35 = vld [vmem:[%s0] sm:$0xff]
    %v36 = vld [vmem:[%s0 + $0x8] sm:$0xff]
    %vm37 = vcmask 261120
    %v38 = vsel %vm37, %v35, 0.0
    %39 = vadd.xlane.f32.xlu0 %v38
    %v40 = vpop.xlane.xlu0 %39
    %v41 = vsel %vm37, %v36, 0.0
    %42 = vadd.xlane.f32.xlu0 %v41
    %v43 = vpop.xlane.xlu0 %42
    %v44 = vrcp.pop 32.0
    %v45 = vmul.f32 32.0, %v44
    %v46 = vsub.f32 1.0, %v45
    %v47 = vmul.f32 %v44, %v46
    %v48 = vadd.f32 %v44, %v47
    %vm49 = vweird.f32 %v44
    %v50 = vsel %vm49, %v44, %v48
    %v51 = vmul.f32 %v40, %v50
    %v52 = vmul.f32 %v43, %v50
    %v53 = vsub.f32 %v35, %v51
    %v54 = vsub.f32 %v36, %v52
    %v55 = vmul.f32 %v53, %v53
    %v56 = vmul.f32 %v54, %v54
    %v57 = vsel %vm37, %v55, 0.0
    %58 = vadd.xlane.f32.xlu0 %v57
    %v59 = vpop.xlane.xlu0 %58
    %v60 = vsel %vm37, %v56, 0.0
    %61 = vadd.xlane.f32.xlu0 %v60
    %v62 = vpop.xlane.xlu0 %61
    %v63 = vmul.f32 %v59, %v50
    %v64 = vmul.f32 %v62, %v50
    %v65 = vadd.f32 %v63, 1e-12
    %v66 = vadd.f32 %v64, 1e-12
    %v67 = vrsqrt.pop %v65
    %v68 = vmul.f32 %v67, %v65
    %v69 = vmul.f32 %v68, %v67
    %v70 = vmul.f32 0.5, %v69
    %v71 = vsub.f32 1.5, %v70
    %v72 = vmul.f32 %v67, %v71
    %vm73 = vweird.f32 %v65
    %vm74 = vweird.f32 %v67
    %vm75 = vmor %vm73, %vm74
    %v76 = vsel %vm75, %v67, %v72
    %v77 = vrsqrt.pop %v66
    %v78 = vmul.f32 %v77, %v66
    %v79 = vmul.f32 %v78, %v77
    %v80 = vmul.f32 0.5, %v79
    %v81 = vsub.f32 1.5, %v80
    %v82 = vmul.f32 %v77, %v81
    %vm83 = vweird.f32 %v66
    %vm84 = vweird.f32 %v77
    %vm85 = vmor %vm83, %vm84
    %v86 = vsel %vm85, %v77, %v82
    %v87 = vmul.f32 %v53, %v76
    %v88 = vmul.f32 %v54, %v86
    %v89 = vperm.slane %v34, 0
    %v90 = vmul.f32 %v87, %v89
    %v91 = vmul.f32 %v88, %v89
    %v92 = vperm.slane %v34, 1
    %v93 = vadd.f32 %v90, %v92
    %v94 = vadd.f32 %v91, %v92
    %v95 = vld [vmem:[%s1] sm:$0x3]
    %v96 = vsub.f32 1.0, %v95
    %v97 = vmul.f32 %v96, -1e+09
    %v99 = vrot.slane %v97, 1
    %v100 = vperm.slane %v97, 0
    %v101 = vperm.slane %v99, 0
    %v104 = vld [vmem:[%s2] sm:$0xf]
    %v105 = vld [vmem:[%s2 + $0x4] sm:$0xf]
    %v106 = vld [vmem:[%s2 + $0x8] sm:$0xf]
    %v107 = vld [vmem:[%s2 + $0xc] sm:$0xf]
    %v108 = vld [vmem:[%s3] sm:$0xf]
    %v109 = vld [vmem:[%s3 + $0x4] sm:$0xf]
    %v110 = vld [vmem:[%s3 + $0x8] sm:$0xf]
    %v111 = vld [vmem:[%s3 + $0xc] sm:$0xf]
    %v112 = vld [vmem:[%s4] sm:$0xf]
    %v113 = vld [vmem:[%s4 + $0x4] sm:$0xf]
    %v114 = vld [vmem:[%s4 + $0x8] sm:$0xf]
    %v115 = vld [vmem:[%s4 + $0xc] sm:$0xf]
    %v116 = vld [vmem:[%s5] sm:$0xf]
    %v117 = vld [vmem:[%s5 + $0x4] sm:$0xf]
    %v118 = vld [vmem:[%s5 + $0x8] sm:$0xf]
    %v119 = vld [vmem:[%s5 + $0xc] sm:$0xf]
    %v120 = vld [vmem:[%s5 + $0x10] sm:$0xf]
    %v121 = vld [vmem:[%s5 + $0x14] sm:$0xf]
    %v122 = vld [vmem:[%s5 + $0x18] sm:$0xf]
    %v123 = vld [vmem:[%s5 + $0x1c] sm:$0xf]
    %v124 = vld [vmem:[%s6] sm:$0xff]
    %v125 = vpack.c.bf16 %v94, %v93
    %v126 = vperm.slane %v124, 0
    %v131 = vunpack.c.l.b16 %v104
    %v132 = vunpack.c.l.b16 %v105
    %v133 = vunpack.c.l.b16 %v106
    %v134 = vunpack.c.l.b16 %v107
    %v135 = vpack.c.b16 %v132, %v131
    %v136 = vpack.c.b16 %v134, %v133
    %v140 = vsel %vm37, %v125, 0
    %142 = vmatpush.bf16.msra.mxu0 0
    %143 = vmatpush.bf16.msra.mxu0 0
    %144 = vmatpush.bf16.msra.mxu0 0
    %145 = vmatpush.bf16.msra.mxu0 0
    %146 = vmatpush.bf16.msra.mxu0 0
    %147 = vmatpush.bf16.msra.mxu0 0
    %148 = vmatpush.bf16.msra.mxu0 %v136
    %149 = vmatpush.bf16.msra.mxu0 %v135
    %150 = vmatmul.bf16.gmra.mxu0 %v140
    %v151 = vpop.f32.mrf.mxu0
    %v152 = vadd.f32 %v126, %v151
    %v153 = vpop.f32.mrf.mxu0
    %v154 = vadd.f32 %v126, %v153
    %155 = vdwg.mxu0
    %v156 = vpack.c.bf16 %v152, %v152
    %v157 = vpack.c.bf16 %v154, %v154
    %v159 = vunpack.c.l.b16 %v156
    %v160 = vpack.c.b16 %v159, %v159
    %161 = vrot.lane.b32.xlu0 %v160, 96
    %v162 = vpop.permute.xlu0 %161
    %vm163 = vcmask 64512
    %v165 = vsel %vm163, %v156, 0
    %v168 = vsel %vm163, %v162, 0
    %170 = vmatpush.bf16.xpose.msra.mxu0 0
    %171 = vmatpush.bf16.xpose.msra.mxu0 0
    %172 = vmatpush.bf16.xpose.msra.mxu0 0
    %173 = vmatpush.bf16.xpose.msra.mxu0 0
    %174 = vmatpush.bf16.xpose.msra.mxu0 0
    %175 = vmatpush.bf16.xpose.msra.mxu0 0
    %176 = vmatpush.bf16.xpose.msra.mxu0 0
    %177 = vmatpush.bf16.xpose.msra.mxu0 %v168
    %178 = vmatmul.bf16.gmra.mxu0 %v165
    %v179 = vpop.f32.mrf.mxu0
    %v180 = vadd.f32 %v100, %v179
    %v181 = vpop.f32.mrf.mxu0
    %182 = vdwg.mxu0
    %v184 = vunpack.c.l.b16 %v157
    %v185 = vpack.c.b16 %v184, %v184
    %186 = vrot.lane.b32.xlu0 %v185, 96
    %v187 = vpop.permute.xlu0 %186
    %v189 = vsel %vm163, %v157, 0
    %v192 = vsel %vm163, %v187, 0
    %194 = vmatpush.bf16.xpose.msra.mxu0 0
    %195 = vmatpush.bf16.xpose.msra.mxu0 0
    %196 = vmatpush.bf16.xpose.msra.mxu0 0
    %197 = vmatpush.bf16.xpose.msra.mxu0 0
    %198 = vmatpush.bf16.xpose.msra.mxu0 0
    %199 = vmatpush.bf16.xpose.msra.mxu0 0
    %200 = vmatpush.bf16.xpose.msra.mxu0 0
    %201 = vmatpush.bf16.xpose.msra.mxu0 %v192
    %202 = vmatmul.bf16.gmra.mxu0 %v189
    %v203 = vpop.f32.mrf.mxu0
    %v204 = vadd.f32 %v101, %v203
    %v205 = vpop.f32.mrf.mxu0
    %206 = vdwg.mxu0
    %v207 = vsel %vm163, %v180, -inf
    %208 = vmax.xlane.f32.xlu0 %v207
    %v209 = vpop.xlane.xlu0 %208
    %v210 = vsel %vm163, %v204, -inf
    %211 = vmax.xlane.f32.xlu0 %v210
    %v212 = vpop.xlane.xlu0 %211
    %v213 = vsub.f32 %v180, %v209
    %v214 = vsub.f32 %v204, %v212
    %v215 = vmul.f32 %v213, 1.442695
    %v216 = vpow.pop %v215
    %v217 = vmul.f32 %v214, 1.442695
    %v218 = vpow.pop %v217
    %v219 = vsel %vm163, %v216, 0.0
    %220 = vadd.xlane.f32.xlu0 %v219
    %v221 = vpop.xlane.xlu0 %220
    %v222 = vsel %vm163, %v218, 0.0
    %223 = vadd.xlane.f32.xlu0 %v222
    %v224 = vpop.xlane.xlu0 %223
    %v225 = vrcp.pop %v221
    %v226 = vrcp.pop %v224
    %v227 = vmul.f32 %v216, %v225
    %v228 = vmul.f32 %v218, %v226
    %v229 = vpack.c.bf16 %v227, %v227
    %v230 = vpack.c.bf16 %v228, %v228
    %231 = vrot.lane.b32.xlu0 %v160, 64
    %v232 = vpop.permute.xlu0 %231
    %v234 = vsel %vm163, %v229, 0
    %vm236 = vcmask 1043456
    %v238 = vsel %vm236, %v232, 0
    %240 = vmatpush.bf16.msra.mxu0 0
    %241 = vmatpush.bf16.msra.mxu0 0
    %242 = vmatpush.bf16.msra.mxu0 0
    %243 = vmatpush.bf16.msra.mxu0 0
    %244 = vmatpush.bf16.msra.mxu0 0
    %245 = vmatpush.bf16.msra.mxu0 0
    %246 = vmatpush.bf16.msra.mxu0 0
    %247 = vmatpush.bf16.msra.mxu0 %v238
    %248 = vmatmul.bf16.gmra.mxu0 %v234
    %v249 = vpop.f32.mrf.mxu0
    %v250 = vadd.f32 0.0, %v249
    %v251 = vpop.f32.mrf.mxu0
    %252 = vdwg.mxu0
    %253 = vrot.lane.b32.xlu0 %v185, 64
    %v254 = vpop.permute.xlu0 %253
    %v256 = vsel %vm163, %v230, 0
    %v259 = vsel %vm236, %v254, 0
    %261 = vmatpush.bf16.msra.mxu0 0
    %262 = vmatpush.bf16.msra.mxu0 0
    %263 = vmatpush.bf16.msra.mxu0 0
    %264 = vmatpush.bf16.msra.mxu0 0
    %265 = vmatpush.bf16.msra.mxu0 0
    %266 = vmatpush.bf16.msra.mxu0 0
    %267 = vmatpush.bf16.msra.mxu0 0
    %268 = vmatpush.bf16.msra.mxu0 %v259
    %269 = vmatmul.bf16.gmra.mxu0 %v256
    %v270 = vpop.f32.mrf.mxu0
    %v271 = vadd.f32 0.0, %v270
    %v272 = vpop.f32.mrf.mxu0
    %273 = vdwg.mxu0
    %274 = vrot.lane.b32.xlu0 %v160, 120
    %v275 = vpop.permute.xlu0 %274
    %276 = vrot.lane.b32.xlu0 %v160, 88
    %v277 = vpop.permute.xlu0 %276
    %v279 = vsel %vm163, %v275, 0
    %v282 = vsel %vm163, %v277, 0
    %284 = vmatpush.bf16.xpose.msra.mxu0 0
    %285 = vmatpush.bf16.xpose.msra.mxu0 0
    %286 = vmatpush.bf16.xpose.msra.mxu0 0
    %287 = vmatpush.bf16.xpose.msra.mxu0 0
    %288 = vmatpush.bf16.xpose.msra.mxu0 0
    %289 = vmatpush.bf16.xpose.msra.mxu0 0
    %290 = vmatpush.bf16.xpose.msra.mxu0 0
    %291 = vmatpush.bf16.xpose.msra.mxu0 %v282
    %292 = vmatmul.bf16.gmra.mxu0 %v279
    %v293 = vpop.f32.mrf.mxu0
    %v294 = vadd.f32 %v100, %v293
    %v295 = vpop.f32.mrf.mxu0
    %296 = vdwg.mxu0
    %297 = vrot.lane.b32.xlu0 %v185, 120
    %v298 = vpop.permute.xlu0 %297
    %299 = vrot.lane.b32.xlu0 %v185, 88
    %v300 = vpop.permute.xlu0 %299
    %v302 = vsel %vm163, %v298, 0
    %v305 = vsel %vm163, %v300, 0
    %307 = vmatpush.bf16.xpose.msra.mxu0 0
    %308 = vmatpush.bf16.xpose.msra.mxu0 0
    %309 = vmatpush.bf16.xpose.msra.mxu0 0
    %310 = vmatpush.bf16.xpose.msra.mxu0 0
    %311 = vmatpush.bf16.xpose.msra.mxu0 0
    %312 = vmatpush.bf16.xpose.msra.mxu0 0
    %313 = vmatpush.bf16.xpose.msra.mxu0 0
    %314 = vmatpush.bf16.xpose.msra.mxu0 %v305
    %315 = vmatmul.bf16.gmra.mxu0 %v302
    %v316 = vpop.f32.mrf.mxu0
    %v317 = vadd.f32 %v101, %v316
    %v318 = vpop.f32.mrf.mxu0
    %319 = vdwg.mxu0
    %v320 = vsel %vm163, %v294, -inf
    %321 = vmax.xlane.f32.xlu0 %v320
    %v322 = vpop.xlane.xlu0 %321
    %v323 = vsel %vm163, %v317, -inf
    %324 = vmax.xlane.f32.xlu0 %v323
    %v325 = vpop.xlane.xlu0 %324
    %v326 = vsub.f32 %v294, %v322
    %v327 = vsub.f32 %v317, %v325
    %v328 = vmul.f32 %v326, 1.442695
    %v329 = vpow.pop %v328
    %v330 = vmul.f32 %v327, 1.442695
    %v331 = vpow.pop %v330
    %v332 = vsel %vm163, %v329, 0.0
    %333 = vadd.xlane.f32.xlu0 %v332
    %v334 = vpop.xlane.xlu0 %333
    %v335 = vsel %vm163, %v331, 0.0
    %336 = vadd.xlane.f32.xlu0 %v335
    %v337 = vpop.xlane.xlu0 %336
    %v338 = vrcp.pop %v334
    %v339 = vrcp.pop %v337
    %v340 = vmul.f32 %v329, %v338
    %v341 = vmul.f32 %v331, %v339
    %v342 = vpack.c.bf16 %v340, %v340
    %v343 = vpack.c.bf16 %v341, %v341
    %344 = vrot.lane.b32.xlu0 %v160, 56
    %v345 = vpop.permute.xlu0 %344
    %v347 = vsel %vm163, %v342, 0
    %v350 = vsel %vm236, %v345, 0
    %352 = vmatpush.bf16.msra.mxu0 0
    %353 = vmatpush.bf16.msra.mxu0 0
    %354 = vmatpush.bf16.msra.mxu0 0
    %355 = vmatpush.bf16.msra.mxu0 0
    %356 = vmatpush.bf16.msra.mxu0 0
    %357 = vmatpush.bf16.msra.mxu0 0
    %358 = vmatpush.bf16.msra.mxu0 0
    %359 = vmatpush.bf16.msra.mxu0 %v350
    %360 = vmatmul.bf16.gmra.mxu0 %v347
    %v361 = vpop.f32.mrf.mxu0
    %v362 = vadd.f32 0.0, %v361
    %v363 = vpop.f32.mrf.mxu0
    %364 = vdwg.mxu0
    %365 = vrot.lane.b32.xlu0 %v185, 56
    %v366 = vpop.permute.xlu0 %365
    %v368 = vsel %vm163, %v343, 0
    %v371 = vsel %vm236, %v366, 0
    %373 = vmatpush.bf16.msra.mxu0 0
    %374 = vmatpush.bf16.msra.mxu0 0
    %375 = vmatpush.bf16.msra.mxu0 0
    %376 = vmatpush.bf16.msra.mxu0 0
    %377 = vmatpush.bf16.msra.mxu0 0
    %378 = vmatpush.bf16.msra.mxu0 0
    %379 = vmatpush.bf16.msra.mxu0 0
    %380 = vmatpush.bf16.msra.mxu0 %v371
    %381 = vmatmul.bf16.gmra.mxu0 %v368
    %v382 = vpop.f32.mrf.mxu0
    %v383 = vadd.f32 0.0, %v382
    %v384 = vpop.f32.mrf.mxu0
    %385 = vdwg.mxu0
    %386 = vrot.lane.b32.xlu0 %v160, 112
    %v387 = vpop.permute.xlu0 %386
    %388 = vrot.lane.b32.xlu0 %v160, 80
    %v389 = vpop.permute.xlu0 %388
    %v391 = vsel %vm163, %v387, 0
    %v394 = vsel %vm163, %v389, 0
    %396 = vmatpush.bf16.xpose.msra.mxu0 0
    %397 = vmatpush.bf16.xpose.msra.mxu0 0
    %398 = vmatpush.bf16.xpose.msra.mxu0 0
    %399 = vmatpush.bf16.xpose.msra.mxu0 0
    %400 = vmatpush.bf16.xpose.msra.mxu0 0
    %401 = vmatpush.bf16.xpose.msra.mxu0 0
    %402 = vmatpush.bf16.xpose.msra.mxu0 0
    %403 = vmatpush.bf16.xpose.msra.mxu0 %v394
    %404 = vmatmul.bf16.gmra.mxu0 %v391
    %v405 = vpop.f32.mrf.mxu0
    %v406 = vadd.f32 %v100, %v405
    %v407 = vpop.f32.mrf.mxu0
    %408 = vdwg.mxu0
    %409 = vrot.lane.b32.xlu0 %v185, 112
    %v410 = vpop.permute.xlu0 %409
    %411 = vrot.lane.b32.xlu0 %v185, 80
    %v412 = vpop.permute.xlu0 %411
    %v414 = vsel %vm163, %v410, 0
    %v417 = vsel %vm163, %v412, 0
    %419 = vmatpush.bf16.xpose.msra.mxu0 0
    %420 = vmatpush.bf16.xpose.msra.mxu0 0
    %421 = vmatpush.bf16.xpose.msra.mxu0 0
    %422 = vmatpush.bf16.xpose.msra.mxu0 0
    %423 = vmatpush.bf16.xpose.msra.mxu0 0
    %424 = vmatpush.bf16.xpose.msra.mxu0 0
    %425 = vmatpush.bf16.xpose.msra.mxu0 0
    %426 = vmatpush.bf16.xpose.msra.mxu0 %v417
    %427 = vmatmul.bf16.gmra.mxu0 %v414
    %v428 = vpop.f32.mrf.mxu0
    %v429 = vadd.f32 %v101, %v428
    %v430 = vpop.f32.mrf.mxu0
    %431 = vdwg.mxu0
    %v432 = vsel %vm163, %v406, -inf
    %433 = vmax.xlane.f32.xlu0 %v432
    %v434 = vpop.xlane.xlu0 %433
    %v435 = vsel %vm163, %v429, -inf
    %436 = vmax.xlane.f32.xlu0 %v435
    %v437 = vpop.xlane.xlu0 %436
    %v438 = vsub.f32 %v406, %v434
    %v439 = vsub.f32 %v429, %v437
    %v440 = vmul.f32 %v438, 1.442695
    %v441 = vpow.pop %v440
    %v442 = vmul.f32 %v439, 1.442695
    %v443 = vpow.pop %v442
    %v444 = vsel %vm163, %v441, 0.0
    %445 = vadd.xlane.f32.xlu0 %v444
    %v446 = vpop.xlane.xlu0 %445
    %v447 = vsel %vm163, %v443, 0.0
    %448 = vadd.xlane.f32.xlu0 %v447
    %v449 = vpop.xlane.xlu0 %448
    %v450 = vrcp.pop %v446
    %v451 = vrcp.pop %v449
    %v452 = vmul.f32 %v441, %v450
    %v453 = vmul.f32 %v443, %v451
    %v454 = vpack.c.bf16 %v452, %v452
    %v455 = vpack.c.bf16 %v453, %v453
    %456 = vrot.lane.b32.xlu0 %v160, 48
    %v457 = vpop.permute.xlu0 %456
    %v459 = vsel %vm163, %v454, 0
    %v462 = vsel %vm236, %v457, 0
    %464 = vmatpush.bf16.msra.mxu0 0
    %465 = vmatpush.bf16.msra.mxu0 0
    %466 = vmatpush.bf16.msra.mxu0 0
    %467 = vmatpush.bf16.msra.mxu0 0
    %468 = vmatpush.bf16.msra.mxu0 0
    %469 = vmatpush.bf16.msra.mxu0 0
    %470 = vmatpush.bf16.msra.mxu0 0
    %471 = vmatpush.bf16.msra.mxu0 %v462
    %472 = vmatmul.bf16.gmra.mxu0 %v459
    %v473 = vpop.f32.mrf.mxu0
    %v474 = vadd.f32 0.0, %v473
    %v475 = vpop.f32.mrf.mxu0
    %476 = vdwg.mxu0
    %477 = vrot.lane.b32.xlu0 %v185, 48
    %v478 = vpop.permute.xlu0 %477
    %v480 = vsel %vm163, %v455, 0
    %v483 = vsel %vm236, %v478, 0
    %485 = vmatpush.bf16.msra.mxu0 0
    %486 = vmatpush.bf16.msra.mxu0 0
    %487 = vmatpush.bf16.msra.mxu0 0
    %488 = vmatpush.bf16.msra.mxu0 0
    %489 = vmatpush.bf16.msra.mxu0 0
    %490 = vmatpush.bf16.msra.mxu0 0
    %491 = vmatpush.bf16.msra.mxu0 0
    %492 = vmatpush.bf16.msra.mxu0 %v483
    %493 = vmatmul.bf16.gmra.mxu0 %v480
    %v494 = vpop.f32.mrf.mxu0
    %v495 = vadd.f32 0.0, %v494
    %v496 = vpop.f32.mrf.mxu0
    %497 = vdwg.mxu0
    %498 = vrot.lane.b32.xlu0 %v160, 104
    %v499 = vpop.permute.xlu0 %498
    %500 = vrot.lane.b32.xlu0 %v160, 72
    %v501 = vpop.permute.xlu0 %500
    %v503 = vsel %vm163, %v499, 0
    %v506 = vsel %vm163, %v501, 0
    %508 = vmatpush.bf16.xpose.msra.mxu0 0
    %509 = vmatpush.bf16.xpose.msra.mxu0 0
    %510 = vmatpush.bf16.xpose.msra.mxu0 0
    %511 = vmatpush.bf16.xpose.msra.mxu0 0
    %512 = vmatpush.bf16.xpose.msra.mxu0 0
    %513 = vmatpush.bf16.xpose.msra.mxu0 0
    %514 = vmatpush.bf16.xpose.msra.mxu0 0
    %515 = vmatpush.bf16.xpose.msra.mxu0 %v506
    %516 = vmatmul.bf16.gmra.mxu0 %v503
    %v517 = vpop.f32.mrf.mxu0
    %v518 = vadd.f32 %v100, %v517
    %v519 = vpop.f32.mrf.mxu0
    %520 = vdwg.mxu0
    %521 = vrot.lane.b32.xlu0 %v185, 104
    %v522 = vpop.permute.xlu0 %521
    %523 = vrot.lane.b32.xlu0 %v185, 72
    %v524 = vpop.permute.xlu0 %523
    %v526 = vsel %vm163, %v522, 0
    %v529 = vsel %vm163, %v524, 0
    %531 = vmatpush.bf16.xpose.msra.mxu0 0
    %532 = vmatpush.bf16.xpose.msra.mxu0 0
    %533 = vmatpush.bf16.xpose.msra.mxu0 0
    %534 = vmatpush.bf16.xpose.msra.mxu0 0
    %535 = vmatpush.bf16.xpose.msra.mxu0 0
    %536 = vmatpush.bf16.xpose.msra.mxu0 0
    %537 = vmatpush.bf16.xpose.msra.mxu0 0
    %538 = vmatpush.bf16.xpose.msra.mxu0 %v529
    %539 = vmatmul.bf16.gmra.mxu0 %v526
    %v540 = vpop.f32.mrf.mxu0
    %v541 = vadd.f32 %v101, %v540
    %v542 = vpop.f32.mrf.mxu0
    %543 = vdwg.mxu0
    %v544 = vsel %vm163, %v518, -inf
    %545 = vmax.xlane.f32.xlu0 %v544
    %v546 = vpop.xlane.xlu0 %545
    %v547 = vsel %vm163, %v541, -inf
    %548 = vmax.xlane.f32.xlu0 %v547
    %v549 = vpop.xlane.xlu0 %548
    %v550 = vsub.f32 %v518, %v546
    %v551 = vsub.f32 %v541, %v549
    %v552 = vmul.f32 %v550, 1.442695
    %v553 = vpow.pop %v552
    %v554 = vmul.f32 %v551, 1.442695
    %v555 = vpow.pop %v554
    %v556 = vsel %vm163, %v553, 0.0
    %557 = vadd.xlane.f32.xlu0 %v556
    %v558 = vpop.xlane.xlu0 %557
    %v559 = vsel %vm163, %v555, 0.0
    %560 = vadd.xlane.f32.xlu0 %v559
    %v561 = vpop.xlane.xlu0 %560
    %v562 = vrcp.pop %v558
    %v563 = vrcp.pop %v561
    %v564 = vmul.f32 %v553, %v562
    %v565 = vmul.f32 %v555, %v563
    %v566 = vpack.c.bf16 %v564, %v564
    %v567 = vpack.c.bf16 %v565, %v565
    %568 = vrot.lane.b32.xlu0 %v160, 40
    %v569 = vpop.permute.xlu0 %568
    %v571 = vsel %vm163, %v566, 0
    %v574 = vsel %vm236, %v569, 0
    %576 = vmatpush.bf16.msra.mxu0 0
    %577 = vmatpush.bf16.msra.mxu0 0
    %578 = vmatpush.bf16.msra.mxu0 0
    %579 = vmatpush.bf16.msra.mxu0 0
    %580 = vmatpush.bf16.msra.mxu0 0
    %581 = vmatpush.bf16.msra.mxu0 0
    %582 = vmatpush.bf16.msra.mxu0 0
    %583 = vmatpush.bf16.msra.mxu0 %v574
    %584 = vmatmul.bf16.gmra.mxu0 %v571
    %v585 = vpop.f32.mrf.mxu0
    %v586 = vadd.f32 0.0, %v585
    %v587 = vpop.f32.mrf.mxu0
    %588 = vdwg.mxu0
    %589 = vrot.lane.b32.xlu0 %v185, 40
    %v590 = vpop.permute.xlu0 %589
    %v592 = vsel %vm163, %v567, 0
    %v595 = vsel %vm236, %v590, 0
    %597 = vmatpush.bf16.msra.mxu0 0
    %598 = vmatpush.bf16.msra.mxu0 0
    %599 = vmatpush.bf16.msra.mxu0 0
    %600 = vmatpush.bf16.msra.mxu0 0
    %601 = vmatpush.bf16.msra.mxu0 0
    %602 = vmatpush.bf16.msra.mxu0 0
    %603 = vmatpush.bf16.msra.mxu0 0
    %604 = vmatpush.bf16.msra.mxu0 %v595
    %605 = vmatmul.bf16.gmra.mxu0 %v592
    %v606 = vpop.f32.mrf.mxu0
    %v607 = vadd.f32 0.0, %v606
    %v608 = vpop.f32.mrf.mxu0
    %609 = vdwg.mxu0
    %612 = vrot.lane.b32.xlu0 %v362, 8
    %v613 = vpop.permute.xlu0 %612
    %614 = vrot.lane.b32.xlu0 %v383, 8
    %v615 = vpop.permute.xlu0 %614
    %620 = vrot.lane.b32.xlu0 %v474, 16
    %v621 = vpop.permute.xlu0 %620
    %622 = vrot.lane.b32.xlu0 %v495, 16
    %v623 = vpop.permute.xlu0 %622
    %628 = vrot.lane.b32.xlu0 %v586, 24
    %v629 = vpop.permute.xlu0 %628
    %630 = vrot.lane.b32.xlu0 %v607, 24
    %v631 = vpop.permute.xlu0 %630
    %v634 = vsel %vm163, %v250, %v613
    %v635 = vsel %vm163, %v271, %v615
    %vm636 = vcmask 130048
    %v637 = vsel %vm636, %v634, %v621
    %v638 = vsel %vm636, %v635, %v623
    %vm639 = vcmask 195584
    %v640 = vsel %vm639, %v637, %v629
    %v641 = vsel %vm639, %v638, %v631
    %v642 = vpack.c.bf16 %v641, %v640
    %v643 = vperm.slane %v124, 1
    %v648 = vunpack.c.l.b16 %v108
    %v649 = vunpack.c.l.b16 %v109
    %v650 = vunpack.c.l.b16 %v110
    %v651 = vunpack.c.l.b16 %v111
    %v652 = vpack.c.b16 %v649, %v648
    %v653 = vpack.c.b16 %v651, %v650
    %v657 = vsel %vm37, %v642, 0
    %659 = vmatpush.bf16.msra.mxu0 0
    %660 = vmatpush.bf16.msra.mxu0 0
    %661 = vmatpush.bf16.msra.mxu0 0
    %662 = vmatpush.bf16.msra.mxu0 0
    %663 = vmatpush.bf16.msra.mxu0 0
    %664 = vmatpush.bf16.msra.mxu0 0
    %665 = vmatpush.bf16.msra.mxu0 %v653
    %666 = vmatpush.bf16.msra.mxu0 %v652
    %667 = vmatmul.bf16.gmra.mxu0 %v657
    %v668 = vpop.f32.mrf.mxu0
    %v669 = vadd.f32 %v643, %v668
    %v670 = vpop.f32.mrf.mxu0
    %v671 = vadd.f32 %v643, %v670
    %672 = vdwg.mxu0
    %v673 = vadd.f32 %v93, %v669
    %v674 = vadd.f32 %v94, %v671
    %v675 = vsel %vm37, %v673, 0.0
    %676 = vadd.xlane.f32.xlu0 %v675
    %v677 = vpop.xlane.xlu0 %676
    %v678 = vsel %vm37, %v674, 0.0
    %679 = vadd.xlane.f32.xlu0 %v678
    %v680 = vpop.xlane.xlu0 %679
    %v681 = vmul.f32 %v677, %v50
    %v682 = vmul.f32 %v680, %v50
    %v683 = vsub.f32 %v673, %v681
    %v684 = vsub.f32 %v674, %v682
    %v685 = vmul.f32 %v683, %v683
    %v686 = vmul.f32 %v684, %v684
    %v687 = vsel %vm37, %v685, 0.0
    %688 = vadd.xlane.f32.xlu0 %v687
    %v689 = vpop.xlane.xlu0 %688
    %v690 = vsel %vm37, %v686, 0.0
    %691 = vadd.xlane.f32.xlu0 %v690
    %v692 = vpop.xlane.xlu0 %691
    %v693 = vmul.f32 %v689, %v50
    %v694 = vmul.f32 %v692, %v50
    %v695 = vadd.f32 %v693, 1e-12
    %v696 = vadd.f32 %v694, 1e-12
    %v697 = vrsqrt.pop %v695
    %v698 = vmul.f32 %v697, %v695
    %v699 = vmul.f32 %v698, %v697
    %v700 = vmul.f32 0.5, %v699
    %v701 = vsub.f32 1.5, %v700
    %v702 = vmul.f32 %v697, %v701
    %vm703 = vweird.f32 %v695
    %vm704 = vweird.f32 %v697
    %vm705 = vmor %vm703, %vm704
    %v706 = vsel %vm705, %v697, %v702
    %v707 = vrsqrt.pop %v696
    %v708 = vmul.f32 %v707, %v696
    %v709 = vmul.f32 %v708, %v707
    %v710 = vmul.f32 0.5, %v709
    %v711 = vsub.f32 1.5, %v710
    %v712 = vmul.f32 %v707, %v711
    %vm713 = vweird.f32 %v696
    %vm714 = vweird.f32 %v707
    %vm715 = vmor %vm713, %vm714
    %v716 = vsel %vm715, %v707, %v712
    %v717 = vmul.f32 %v683, %v706
    %v718 = vmul.f32 %v684, %v716
    %v719 = vperm.slane %v124, 3
    %v720 = vmul.f32 %v717, %v719
    %v721 = vmul.f32 %v718, %v719
    %v722 = vperm.slane %v124, 4
    %v723 = vadd.f32 %v720, %v722
    %v724 = vadd.f32 %v721, %v722
    %v725 = vpack.c.bf16 %v724, %v723
    %v726 = vperm.slane %v124, 7
    %v731 = vunpack.c.l.b16 %v112
    %v732 = vunpack.c.l.b16 %v113
    %v733 = vunpack.c.l.b16 %v114
    %v734 = vunpack.c.l.b16 %v115
    %v735 = vpack.c.b16 %v732, %v731
    %v736 = vpack.c.b16 %v734, %v733
    %v740 = vsel %vm37, %v725, 0
    %742 = vmatpush.bf16.msra.mxu0 0
    %743 = vmatpush.bf16.msra.mxu0 0
    %744 = vmatpush.bf16.msra.mxu0 0
    %745 = vmatpush.bf16.msra.mxu0 0
    %746 = vmatpush.bf16.msra.mxu0 0
    %747 = vmatpush.bf16.msra.mxu0 0
    %748 = vmatpush.bf16.msra.mxu0 %v736
    %749 = vmatpush.bf16.msra.mxu0 %v735
    %750 = vmatmul.bf16.gmra.mxu0 %v740
    %v751 = vpop.f32.mrf.mxu0
    %v752 = vadd.f32 %v726, %v751
    %v753 = vpop.f32.mrf.mxu0
    %v754 = vadd.f32 %v726, %v753
    %755 = vdwg.mxu0
    %v756 = vmul.f32 %v752, %v752
    %v757 = vmul.f32 %v754, %v754
    %v758 = vmul.f32 %v752, %v756
    %v759 = vmul.f32 %v754, %v757
    %v760 = vmul.f32 %v758, 0.044715
    %v761 = vmul.f32 %v759, 0.044715
    %v762 = vadd.f32 %v752, %v760
    %v763 = vadd.f32 %v754, %v761
    %v764 = vmul.f32 %v762, 0.7978846
    %v765 = vmul.f32 %v763, 0.7978846
    %v766 = vtanh.pop %v764
    %v767 = vtanh.pop %v765
    %v768 = vadd.f32 %v766, 1.0
    %v769 = vadd.f32 %v767, 1.0
    %v770 = vmul.f32 %v768, 0.5
    %v771 = vmul.f32 %v769, 0.5
    %v772 = vmul.f32 %v752, %v770
    %v773 = vmul.f32 %v754, %v771
    %v774 = vpack.c.bf16 %v773, %v772
    %v775 = vperm.slane %v124, 2
    %v784 = vunpack.c.l.b16 %v116
    %v785 = vunpack.c.l.b16 %v117
    %v786 = vunpack.c.l.b16 %v118
    %v787 = vunpack.c.l.b16 %v119
    %v788 = vunpack.c.l.b16 %v120
    %v789 = vunpack.c.l.b16 %v121
    %v790 = vunpack.c.l.b16 %v122
    %v791 = vunpack.c.l.b16 %v123
    %v792 = vpack.c.b16 %v785, %v784
    %v793 = vpack.c.b16 %v787, %v786
    %v794 = vpack.c.b16 %v789, %v788
    %v795 = vpack.c.b16 %v791, %v790
    %vm800 = vcmask 523264
    %v802 = vsel %vm800, %v774, 0
    %804 = vmatpush.bf16.msra.mxu0 0
    %805 = vmatpush.bf16.msra.mxu0 0
    %806 = vmatpush.bf16.msra.mxu0 0
    %807 = vmatpush.bf16.msra.mxu0 0
    %808 = vmatpush.bf16.msra.mxu0 %v795
    %809 = vmatpush.bf16.msra.mxu0 %v794
    %810 = vmatpush.bf16.msra.mxu0 %v793
    %811 = vmatpush.bf16.msra.mxu0 %v792
    %812 = vmatmul.bf16.gmra.mxu0 %v802
    %v813 = vpop.f32.mrf.mxu0
    %v814 = vadd.f32 %v775, %v813
    %v815 = vpop.f32.mrf.mxu0
    %v816 = vadd.f32 %v775, %v815
    %817 = vdwg.mxu0
    %v818 = vadd.f32 %v723, %v814
    %v819 = vadd.f32 %v724, %v816
    %v820 = vsel %vm37, %v818, 0.0
    %821 = vadd.xlane.f32.xlu0 %v820
    %v822 = vpop.xlane.xlu0 %821
    %v823 = vsel %vm37, %v819, 0.0
    %824 = vadd.xlane.f32.xlu0 %v823
    %v825 = vpop.xlane.xlu0 %824
    %v826 = vmul.f32 %v822, %v50
    %v827 = vmul.f32 %v825, %v50
    %v828 = vsub.f32 %v818, %v826
    %v829 = vsub.f32 %v819, %v827
    %v830 = vmul.f32 %v828, %v828
    %v831 = vmul.f32 %v829, %v829
    %v832 = vsel %vm37, %v830, 0.0
    %833 = vadd.xlane.f32.xlu0 %v832
    %v834 = vpop.xlane.xlu0 %833
    %v835 = vsel %vm37, %v831, 0.0
    %836 = vadd.xlane.f32.xlu0 %v835
    %v837 = vpop.xlane.xlu0 %836
    %v838 = vmul.f32 %v834, %v50
    %v839 = vmul.f32 %v837, %v50
    %v840 = vadd.f32 %v838, 1e-12
    %v841 = vadd.f32 %v839, 1e-12
    %v842 = vrsqrt.pop %v840
    %v843 = vmul.f32 %v842, %v840
    %v844 = vmul.f32 %v843, %v842
    %v845 = vmul.f32 0.5, %v844
    %v846 = vsub.f32 1.5, %v845
    %v847 = vmul.f32 %v842, %v846
    %vm848 = vweird.f32 %v840
    %vm849 = vweird.f32 %v842
    %vm850 = vmor %vm848, %vm849
    %v851 = vsel %vm850, %v842, %v847
    %v852 = vrsqrt.pop %v841
    %v853 = vmul.f32 %v852, %v841
    %v854 = vmul.f32 %v853, %v852
    %v855 = vmul.f32 0.5, %v854
    %v856 = vsub.f32 1.5, %v855
    %v857 = vmul.f32 %v852, %v856
    %vm858 = vweird.f32 %v841
    %vm859 = vweird.f32 %v852
    %vm860 = vmor %vm858, %vm859
    %v861 = vsel %vm860, %v852, %v857
    %v862 = vmul.f32 %v828, %v851
    %v863 = vmul.f32 %v829, %v861
    %v864 = vperm.slane %v124, 5
    %v865 = vmul.f32 %v862, %v864
    %v866 = vmul.f32 %v863, %v864
    %v867 = vperm.slane %v124, 6
    %v868 = vadd.f32 %v865, %v867
    %v869 = vadd.f32 %v866, %v867
    %s870 = scalar_lea.vmem %s2, 16
    %v871 = vld [vmem:[%s870] sm:$0xf]
    %v872 = vld [vmem:[%s870 + $0x4] sm:$0xf]
    %v873 = vld [vmem:[%s870 + $0x8] sm:$0xf]
    %v874 = vld [vmem:[%s870 + $0xc] sm:$0xf]
    %s875 = scalar_lea.vmem %s3, 16
    %v876 = vld [vmem:[%s875] sm:$0xf]
    %v877 = vld [vmem:[%s875 + $0x4] sm:$0xf]
    %v878 = vld [vmem:[%s875 + $0x8] sm:$0xf]
    %v879 = vld [vmem:[%s875 + $0xc] sm:$0xf]
    %s880 = scalar_lea.vmem %s4, 16
    %v881 = vld [vmem:[%s880] sm:$0xf]
    %v882 = vld [vmem:[%s880 + $0x4] sm:$0xf]
    %v883 = vld [vmem:[%s880 + $0x8] sm:$0xf]
    %v884 = vld [vmem:[%s880 + $0xc] sm:$0xf]
    %s885 = scalar_lea.vmem %s5, 32
    %v886 = vld [vmem:[%s885] sm:$0xf]
    %v887 = vld [vmem:[%s885 + $0x4] sm:$0xf]
    %v888 = vld [vmem:[%s885 + $0x8] sm:$0xf]
    %v889 = vld [vmem:[%s885 + $0xc] sm:$0xf]
    %v890 = vld [vmem:[%s885 + $0x10] sm:$0xf]
    %v891 = vld [vmem:[%s885 + $0x14] sm:$0xf]
    %v892 = vld [vmem:[%s885 + $0x18] sm:$0xf]
    %v893 = vld [vmem:[%s885 + $0x1c] sm:$0xf]
    %s894 = scalar_lea.vmem %s6, 8
    %v895 = vld [vmem:[%s894] sm:$0xff]
    %v896 = vpack.c.bf16 %v869, %v868
    %v897 = vperm.slane %v895, 0
    %v902 = vunpack.c.l.b16 %v871
    %v903 = vunpack.c.l.b16 %v872
    %v904 = vunpack.c.l.b16 %v873
    %v905 = vunpack.c.l.b16 %v874
    %v906 = vpack.c.b16 %v903, %v902
    %v907 = vpack.c.b16 %v905, %v904
    %v911 = vsel %vm37, %v896, 0
    %913 = vmatpush.bf16.msra.mxu0 0
    %914 = vmatpush.bf16.msra.mxu0 0
    %915 = vmatpush.bf16.msra.mxu0 0
    %916 = vmatpush.bf16.msra.mxu0 0
    %917 = vmatpush.bf16.msra.mxu0 0
    %918 = vmatpush.bf16.msra.mxu0 0
    %919 = vmatpush.bf16.msra.mxu0 %v907
    %920 = vmatpush.bf16.msra.mxu0 %v906
    %921 = vmatmul.bf16.gmra.mxu0 %v911
    %v922 = vpop.f32.mrf.mxu0
    %v923 = vadd.f32 %v897, %v922
    %v924 = vpop.f32.mrf.mxu0
    %v925 = vadd.f32 %v897, %v924
    %926 = vdwg.mxu0
    %v927 = vpack.c.bf16 %v923, %v923
    %v928 = vpack.c.bf16 %v925, %v925
    %v930 = vunpack.c.l.b16 %v927
    %v931 = vpack.c.b16 %v930, %v930
    %932 = vrot.lane.b32.xlu0 %v931, 96
    %v933 = vpop.permute.xlu0 %932
    %v935 = vsel %vm163, %v927, 0
    %v938 = vsel %vm163, %v933, 0
    %940 = vmatpush.bf16.xpose.msra.mxu0 0
    %941 = vmatpush.bf16.xpose.msra.mxu0 0
    %942 = vmatpush.bf16.xpose.msra.mxu0 0
    %943 = vmatpush.bf16.xpose.msra.mxu0 0
    %944 = vmatpush.bf16.xpose.msra.mxu0 0
    %945 = vmatpush.bf16.xpose.msra.mxu0 0
    %946 = vmatpush.bf16.xpose.msra.mxu0 0
    %947 = vmatpush.bf16.xpose.msra.mxu0 %v938
    %948 = vmatmul.bf16.gmra.mxu0 %v935
    %v949 = vpop.f32.mrf.mxu0
    %v950 = vadd.f32 %v100, %v949
    %v951 = vpop.f32.mrf.mxu0
    %952 = vdwg.mxu0
    %v954 = vunpack.c.l.b16 %v928
    %v955 = vpack.c.b16 %v954, %v954
    %956 = vrot.lane.b32.xlu0 %v955, 96
    %v957 = vpop.permute.xlu0 %956
    %v959 = vsel %vm163, %v928, 0
    %v962 = vsel %vm163, %v957, 0
    %964 = vmatpush.bf16.xpose.msra.mxu0 0
    %965 = vmatpush.bf16.xpose.msra.mxu0 0
    %966 = vmatpush.bf16.xpose.msra.mxu0 0
    %967 = vmatpush.bf16.xpose.msra.mxu0 0
    %968 = vmatpush.bf16.xpose.msra.mxu0 0
    %969 = vmatpush.bf16.xpose.msra.mxu0 0
    %970 = vmatpush.bf16.xpose.msra.mxu0 0
    %971 = vmatpush.bf16.xpose.msra.mxu0 %v962
    %972 = vmatmul.bf16.gmra.mxu0 %v959
    %v973 = vpop.f32.mrf.mxu0
    %v974 = vadd.f32 %v101, %v973
    %v975 = vpop.f32.mrf.mxu0
    %976 = vdwg.mxu0
    %v977 = vsel %vm163, %v950, -inf
    %978 = vmax.xlane.f32.xlu0 %v977
    %v979 = vpop.xlane.xlu0 %978
    %v980 = vsel %vm163, %v974, -inf
    %981 = vmax.xlane.f32.xlu0 %v980
    %v982 = vpop.xlane.xlu0 %981
    %v983 = vsub.f32 %v950, %v979
    %v984 = vsub.f32 %v974, %v982
    %v985 = vmul.f32 %v983, 1.442695
    %v986 = vpow.pop %v985
    %v987 = vmul.f32 %v984, 1.442695
    %v988 = vpow.pop %v987
    %v989 = vsel %vm163, %v986, 0.0
    %990 = vadd.xlane.f32.xlu0 %v989
    %v991 = vpop.xlane.xlu0 %990
    %v992 = vsel %vm163, %v988, 0.0
    %993 = vadd.xlane.f32.xlu0 %v992
    %v994 = vpop.xlane.xlu0 %993
    %v995 = vrcp.pop %v991
    %v996 = vrcp.pop %v994
    %v997 = vmul.f32 %v986, %v995
    %v998 = vmul.f32 %v988, %v996
    %v999 = vpack.c.bf16 %v997, %v997
    %v1000 = vpack.c.bf16 %v998, %v998
    %1001 = vrot.lane.b32.xlu0 %v931, 64
    %v1002 = vpop.permute.xlu0 %1001
    %v1004 = vsel %vm163, %v999, 0
    %v1007 = vsel %vm236, %v1002, 0
    %1009 = vmatpush.bf16.msra.mxu0 0
    %1010 = vmatpush.bf16.msra.mxu0 0
    %1011 = vmatpush.bf16.msra.mxu0 0
    %1012 = vmatpush.bf16.msra.mxu0 0
    %1013 = vmatpush.bf16.msra.mxu0 0
    %1014 = vmatpush.bf16.msra.mxu0 0
    %1015 = vmatpush.bf16.msra.mxu0 0
    %1016 = vmatpush.bf16.msra.mxu0 %v1007
    %1017 = vmatmul.bf16.gmra.mxu0 %v1004
    %v1018 = vpop.f32.mrf.mxu0
    %v1019 = vadd.f32 0.0, %v1018
    %v1020 = vpop.f32.mrf.mxu0
    %1021 = vdwg.mxu0
    %1022 = vrot.lane.b32.xlu0 %v955, 64
    %v1023 = vpop.permute.xlu0 %1022
    %v1025 = vsel %vm163, %v1000, 0
    %v1028 = vsel %vm236, %v1023, 0
    %1030 = vmatpush.bf16.msra.mxu0 0
    %1031 = vmatpush.bf16.msra.mxu0 0
    %1032 = vmatpush.bf16.msra.mxu0 0
    %1033 = vmatpush.bf16.msra.mxu0 0
    %1034 = vmatpush.bf16.msra.mxu0 0
    %1035 = vmatpush.bf16.msra.mxu0 0
    %1036 = vmatpush.bf16.msra.mxu0 0
    %1037 = vmatpush.bf16.msra.mxu0 %v1028
    %1038 = vmatmul.bf16.gmra.mxu0 %v1025
    %v1039 = vpop.f32.mrf.mxu0
    %v1040 = vadd.f32 0.0, %v1039
    %v1041 = vpop.f32.mrf.mxu0
    %1042 = vdwg.mxu0
    %1043 = vrot.lane.b32.xlu0 %v931, 120
    %v1044 = vpop.permute.xlu0 %1043
    %1045 = vrot.lane.b32.xlu0 %v931, 88
    %v1046 = vpop.permute.xlu0 %1045
    %v1048 = vsel %vm163, %v1044, 0
    %v1051 = vsel %vm163, %v1046, 0
    %1053 = vmatpush.bf16.xpose.msra.mxu0 0
    %1054 = vmatpush.bf16.xpose.msra.mxu0 0
    %1055 = vmatpush.bf16.xpose.msra.mxu0 0
    %1056 = vmatpush.bf16.xpose.msra.mxu0 0
    %1057 = vmatpush.bf16.xpose.msra.mxu0 0
    %1058 = vmatpush.bf16.xpose.msra.mxu0 0
    %1059 = vmatpush.bf16.xpose.msra.mxu0 0
    %1060 = vmatpush.bf16.xpose.msra.mxu0 %v1051
    %1061 = vmatmul.bf16.gmra.mxu0 %v1048
    %v1062 = vpop.f32.mrf.mxu0
    %v1063 = vadd.f32 %v100, %v1062
    %v1064 = vpop.f32.mrf.mxu0
    %1065 = vdwg.mxu0
    %1066 = vrot.lane.b32.xlu0 %v955, 120
    %v1067 = vpop.permute.xlu0 %1066
    %1068 = vrot.lane.b32.xlu0 %v955, 88
    %v1069 = vpop.permute.xlu0 %1068
    %v1071 = vsel %vm163, %v1067, 0
    %v1074 = vsel %vm163, %v1069, 0
    %1076 = vmatpush.bf16.xpose.msra.mxu0 0
    %1077 = vmatpush.bf16.xpose.msra.mxu0 0
    %1078 = vmatpush.bf16.xpose.msra.mxu0 0
    %1079 = vmatpush.bf16.xpose.msra.mxu0 0
    %1080 = vmatpush.bf16.xpose.msra.mxu0 0
    %1081 = vmatpush.bf16.xpose.msra.mxu0 0
    %1082 = vmatpush.bf16.xpose.msra.mxu0 0
    %1083 = vmatpush.bf16.xpose.msra.mxu0 %v1074
    %1084 = vmatmul.bf16.gmra.mxu0 %v1071
    %v1085 = vpop.f32.mrf.mxu0
    %v1086 = vadd.f32 %v101, %v1085
    %v1087 = vpop.f32.mrf.mxu0
    %1088 = vdwg.mxu0
    %v1089 = vsel %vm163, %v1063, -inf
    %1090 = vmax.xlane.f32.xlu0 %v1089
    %v1091 = vpop.xlane.xlu0 %1090
    %v1092 = vsel %vm163, %v1086, -inf
    %1093 = vmax.xlane.f32.xlu0 %v1092
    %v1094 = vpop.xlane.xlu0 %1093
    %v1095 = vsub.f32 %v1063, %v1091
    %v1096 = vsub.f32 %v1086, %v1094
    %v1097 = vmul.f32 %v1095, 1.442695
    %v1098 = vpow.pop %v1097
    %v1099 = vmul.f32 %v1096, 1.442695
    %v1100 = vpow.pop %v1099
    %v1101 = vsel %vm163, %v1098, 0.0
    %1102 = vadd.xlane.f32.xlu0 %v1101
    %v1103 = vpop.xlane.xlu0 %1102
    %v1104 = vsel %vm163, %v1100, 0.0
    %1105 = vadd.xlane.f32.xlu0 %v1104
    %v1106 = vpop.xlane.xlu0 %1105
    %v1107 = vrcp.pop %v1103
    %v1108 = vrcp.pop %v1106
    %v1109 = vmul.f32 %v1098, %v1107
    %v1110 = vmul.f32 %v1100, %v1108
    %v1111 = vpack.c.bf16 %v1109, %v1109
    %v1112 = vpack.c.bf16 %v1110, %v1110
    %1113 = vrot.lane.b32.xlu0 %v931, 56
    %v1114 = vpop.permute.xlu0 %1113
    %v1116 = vsel %vm163, %v1111, 0
    %v1119 = vsel %vm236, %v1114, 0
    %1121 = vmatpush.bf16.msra.mxu0 0
    %1122 = vmatpush.bf16.msra.mxu0 0
    %1123 = vmatpush.bf16.msra.mxu0 0
    %1124 = vmatpush.bf16.msra.mxu0 0
    %1125 = vmatpush.bf16.msra.mxu0 0
    %1126 = vmatpush.bf16.msra.mxu0 0
    %1127 = vmatpush.bf16.msra.mxu0 0
    %1128 = vmatpush.bf16.msra.mxu0 %v1119
    %1129 = vmatmul.bf16.gmra.mxu0 %v1116
    %v1130 = vpop.f32.mrf.mxu0
    %v1131 = vadd.f32 0.0, %v1130
    %v1132 = vpop.f32.mrf.mxu0
    %1133 = vdwg.mxu0
    %1134 = vrot.lane.b32.xlu0 %v955, 56
    %v1135 = vpop.permute.xlu0 %1134
    %v1137 = vsel %vm163, %v1112, 0
    %v1140 = vsel %vm236, %v1135, 0
    %1142 = vmatpush.bf16.msra.mxu0 0
    %1143 = vmatpush.bf16.msra.mxu0 0
    %1144 = vmatpush.bf16.msra.mxu0 0
    %1145 = vmatpush.bf16.msra.mxu0 0
    %1146 = vmatpush.bf16.msra.mxu0 0
    %1147 = vmatpush.bf16.msra.mxu0 0
    %1148 = vmatpush.bf16.msra.mxu0 0
    %1149 = vmatpush.bf16.msra.mxu0 %v1140
    %1150 = vmatmul.bf16.gmra.mxu0 %v1137
    %v1151 = vpop.f32.mrf.mxu0
    %v1152 = vadd.f32 0.0, %v1151
    %v1153 = vpop.f32.mrf.mxu0
    %1154 = vdwg.mxu0
    %1155 = vrot.lane.b32.xlu0 %v931, 112
    %v1156 = vpop.permute.xlu0 %1155
    %1157 = vrot.lane.b32.xlu0 %v931, 80
    %v1158 = vpop.permute.xlu0 %1157
    %v1160 = vsel %vm163, %v1156, 0
    %v1163 = vsel %vm163, %v1158, 0
    %1165 = vmatpush.bf16.xpose.msra.mxu0 0
    %1166 = vmatpush.bf16.xpose.msra.mxu0 0
    %1167 = vmatpush.bf16.xpose.msra.mxu0 0
    %1168 = vmatpush.bf16.xpose.msra.mxu0 0
    %1169 = vmatpush.bf16.xpose.msra.mxu0 0
    %1170 = vmatpush.bf16.xpose.msra.mxu0 0
    %1171 = vmatpush.bf16.xpose.msra.mxu0 0
    %1172 = vmatpush.bf16.xpose.msra.mxu0 %v1163
    %1173 = vmatmul.bf16.gmra.mxu0 %v1160
    %v1174 = vpop.f32.mrf.mxu0
    %v1175 = vadd.f32 %v100, %v1174
    %v1176 = vpop.f32.mrf.mxu0
    %1177 = vdwg.mxu0
    %1178 = vrot.lane.b32.xlu0 %v955, 112
    %v1179 = vpop.permute.xlu0 %1178
    %1180 = vrot.lane.b32.xlu0 %v955, 80
    %v1181 = vpop.permute.xlu0 %1180
    %v1183 = vsel %vm163, %v1179, 0
    %v1186 = vsel %vm163, %v1181, 0
    %1188 = vmatpush.bf16.xpose.msra.mxu0 0
    %1189 = vmatpush.bf16.xpose.msra.mxu0 0
    %1190 = vmatpush.bf16.xpose.msra.mxu0 0
    %1191 = vmatpush.bf16.xpose.msra.mxu0 0
    %1192 = vmatpush.bf16.xpose.msra.mxu0 0
    %1193 = vmatpush.bf16.xpose.msra.mxu0 0
    %1194 = vmatpush.bf16.xpose.msra.mxu0 0
    %1195 = vmatpush.bf16.xpose.msra.mxu0 %v1186
    %1196 = vmatmul.bf16.gmra.mxu0 %v1183
    %v1197 = vpop.f32.mrf.mxu0
    %v1198 = vadd.f32 %v101, %v1197
    %v1199 = vpop.f32.mrf.mxu0
    %1200 = vdwg.mxu0
    %v1201 = vsel %vm163, %v1175, -inf
    %1202 = vmax.xlane.f32.xlu0 %v1201
    %v1203 = vpop.xlane.xlu0 %1202
    %v1204 = vsel %vm163, %v1198, -inf
    %1205 = vmax.xlane.f32.xlu0 %v1204
    %v1206 = vpop.xlane.xlu0 %1205
    %v1207 = vsub.f32 %v1175, %v1203
    %v1208 = vsub.f32 %v1198, %v1206
    %v1209 = vmul.f32 %v1207, 1.442695
    %v1210 = vpow.pop %v1209
    %v1211 = vmul.f32 %v1208, 1.442695
    %v1212 = vpow.pop %v1211
    %v1213 = vsel %vm163, %v1210, 0.0
    %1214 = vadd.xlane.f32.xlu0 %v1213
    %v1215 = vpop.xlane.xlu0 %1214
    %v1216 = vsel %vm163, %v1212, 0.0
    %1217 = vadd.xlane.f32.xlu0 %v1216
    %v1218 = vpop.xlane.xlu0 %1217
    %v1219 = vrcp.pop %v1215
    %v1220 = vrcp.pop %v1218
    %v1221 = vmul.f32 %v1210, %v1219
    %v1222 = vmul.f32 %v1212, %v1220
    %v1223 = vpack.c.bf16 %v1221, %v1221
    %v1224 = vpack.c.bf16 %v1222, %v1222
    %1225 = vrot.lane.b32.xlu0 %v931, 48
    %v1226 = vpop.permute.xlu0 %1225
    %v1228 = vsel %vm163, %v1223, 0
    %v1231 = vsel %vm236, %v1226, 0
    %1233 = vmatpush.bf16.msra.mxu0 0
    %1234 = vmatpush.bf16.msra.mxu0 0
    %1235 = vmatpush.bf16.msra.mxu0 0
    %1236 = vmatpush.bf16.msra.mxu0 0
    %1237 = vmatpush.bf16.msra.mxu0 0
    %1238 = vmatpush.bf16.msra.mxu0 0
    %1239 = vmatpush.bf16.msra.mxu0 0
    %1240 = vmatpush.bf16.msra.mxu0 %v1231
    %1241 = vmatmul.bf16.gmra.mxu0 %v1228
    %v1242 = vpop.f32.mrf.mxu0
    %v1243 = vadd.f32 0.0, %v1242
    %v1244 = vpop.f32.mrf.mxu0
    %1245 = vdwg.mxu0
    %1246 = vrot.lane.b32.xlu0 %v955, 48
    %v1247 = vpop.permute.xlu0 %1246
    %v1249 = vsel %vm163, %v1224, 0
    %v1252 = vsel %vm236, %v1247, 0
    %1254 = vmatpush.bf16.msra.mxu0 0
    %1255 = vmatpush.bf16.msra.mxu0 0
    %1256 = vmatpush.bf16.msra.mxu0 0
    %1257 = vmatpush.bf16.msra.mxu0 0
    %1258 = vmatpush.bf16.msra.mxu0 0
    %1259 = vmatpush.bf16.msra.mxu0 0
    %1260 = vmatpush.bf16.msra.mxu0 0
    %1261 = vmatpush.bf16.msra.mxu0 %v1252
    %1262 = vmatmul.bf16.gmra.mxu0 %v1249
    %v1263 = vpop.f32.mrf.mxu0
    %v1264 = vadd.f32 0.0, %v1263
    %v1265 = vpop.f32.mrf.mxu0
    %1266 = vdwg.mxu0
    %1267 = vrot.lane.b32.xlu0 %v931, 104
    %v1268 = vpop.permute.xlu0 %1267
    %1269 = vrot.lane.b32.xlu0 %v931, 72
    %v1270 = vpop.permute.xlu0 %1269
    %v1272 = vsel %vm163, %v1268, 0
    %v1275 = vsel %vm163, %v1270, 0
    %1277 = vmatpush.bf16.xpose.msra.mxu0 0
    %1278 = vmatpush.bf16.xpose.msra.mxu0 0
    %1279 = vmatpush.bf16.xpose.msra.mxu0 0
    %1280 = vmatpush.bf16.xpose.msra.mxu0 0
    %1281 = vmatpush.bf16.xpose.msra.mxu0 0
    %1282 = vmatpush.bf16.xpose.msra.mxu0 0
    %1283 = vmatpush.bf16.xpose.msra.mxu0 0
    %1284 = vmatpush.bf16.xpose.msra.mxu0 %v1275
    %1285 = vmatmul.bf16.gmra.mxu0 %v1272
    %v1286 = vpop.f32.mrf.mxu0
    %v1287 = vadd.f32 %v100, %v1286
    %v1288 = vpop.f32.mrf.mxu0
    %1289 = vdwg.mxu0
    %1290 = vrot.lane.b32.xlu0 %v955, 104
    %v1291 = vpop.permute.xlu0 %1290
    %1292 = vrot.lane.b32.xlu0 %v955, 72
    %v1293 = vpop.permute.xlu0 %1292
    %v1295 = vsel %vm163, %v1291, 0
    %v1298 = vsel %vm163, %v1293, 0
    %1300 = vmatpush.bf16.xpose.msra.mxu0 0
    %1301 = vmatpush.bf16.xpose.msra.mxu0 0
    %1302 = vmatpush.bf16.xpose.msra.mxu0 0
    %1303 = vmatpush.bf16.xpose.msra.mxu0 0
    %1304 = vmatpush.bf16.xpose.msra.mxu0 0
    %1305 = vmatpush.bf16.xpose.msra.mxu0 0
    %1306 = vmatpush.bf16.xpose.msra.mxu0 0
    %1307 = vmatpush.bf16.xpose.msra.mxu0 %v1298
    %1308 = vmatmul.bf16.gmra.mxu0 %v1295
    %v1309 = vpop.f32.mrf.mxu0
    %v1310 = vadd.f32 %v101, %v1309
    %v1311 = vpop.f32.mrf.mxu0
    %1312 = vdwg.mxu0
    %v1313 = vsel %vm163, %v1287, -inf
    %1314 = vmax.xlane.f32.xlu0 %v1313
    %v1315 = vpop.xlane.xlu0 %1314
    %v1316 = vsel %vm163, %v1310, -inf
    %1317 = vmax.xlane.f32.xlu0 %v1316
    %v1318 = vpop.xlane.xlu0 %1317
    %v1319 = vsub.f32 %v1287, %v1315
    %v1320 = vsub.f32 %v1310, %v1318
    %v1321 = vmul.f32 %v1319, 1.442695
    %v1322 = vpow.pop %v1321
    %v1323 = vmul.f32 %v1320, 1.442695
    %v1324 = vpow.pop %v1323
    %v1325 = vsel %vm163, %v1322, 0.0
    %1326 = vadd.xlane.f32.xlu0 %v1325
    %v1327 = vpop.xlane.xlu0 %1326
    %v1328 = vsel %vm163, %v1324, 0.0
    %1329 = vadd.xlane.f32.xlu0 %v1328
    %v1330 = vpop.xlane.xlu0 %1329
    %v1331 = vrcp.pop %v1327
    %v1332 = vrcp.pop %v1330
    %v1333 = vmul.f32 %v1322, %v1331
    %v1334 = vmul.f32 %v1324, %v1332
    %v1335 = vpack.c.bf16 %v1333, %v1333
    %v1336 = vpack.c.bf16 %v1334, %v1334
    %1337 = vrot.lane.b32.xlu0 %v931, 40
    %v1338 = vpop.permute.xlu0 %1337
    %v1340 = vsel %vm163, %v1335, 0
    %v1343 = vsel %vm236, %v1338, 0
    %1345 = vmatpush.bf16.msra.mxu0 0
    %1346 = vmatpush.bf16.msra.mxu0 0
    %1347 = vmatpush.bf16.msra.mxu0 0
    %1348 = vmatpush.bf16.msra.mxu0 0
    %1349 = vmatpush.bf16.msra.mxu0 0
    %1350 = vmatpush.bf16.msra.mxu0 0
    %1351 = vmatpush.bf16.msra.mxu0 0
    %1352 = vmatpush.bf16.msra.mxu0 %v1343
    %1353 = vmatmul.bf16.gmra.mxu0 %v1340
    %v1354 = vpop.f32.mrf.mxu0
    %v1355 = vadd.f32 0.0, %v1354
    %v1356 = vpop.f32.mrf.mxu0
    %1357 = vdwg.mxu0
    %1358 = vrot.lane.b32.xlu0 %v955, 40
    %v1359 = vpop.permute.xlu0 %1358
    %v1361 = vsel %vm163, %v1336, 0
    %v1364 = vsel %vm236, %v1359, 0
    %1366 = vmatpush.bf16.msra.mxu0 0
    %1367 = vmatpush.bf16.msra.mxu0 0
    %1368 = vmatpush.bf16.msra.mxu0 0
    %1369 = vmatpush.bf16.msra.mxu0 0
    %1370 = vmatpush.bf16.msra.mxu0 0
    %1371 = vmatpush.bf16.msra.mxu0 0
    %1372 = vmatpush.bf16.msra.mxu0 0
    %1373 = vmatpush.bf16.msra.mxu0 %v1364
    %1374 = vmatmul.bf16.gmra.mxu0 %v1361
    %v1375 = vpop.f32.mrf.mxu0
    %v1376 = vadd.f32 0.0, %v1375
    %v1377 = vpop.f32.mrf.mxu0
    %1378 = vdwg.mxu0
    %1381 = vrot.lane.b32.xlu0 %v1131, 8
    %v1382 = vpop.permute.xlu0 %1381
    %1383 = vrot.lane.b32.xlu0 %v1152, 8
    %v1384 = vpop.permute.xlu0 %1383
    %1389 = vrot.lane.b32.xlu0 %v1243, 16
    %v1390 = vpop.permute.xlu0 %1389
    %1391 = vrot.lane.b32.xlu0 %v1264, 16
    %v1392 = vpop.permute.xlu0 %1391
    %1397 = vrot.lane.b32.xlu0 %v1355, 24
    %v1398 = vpop.permute.xlu0 %1397
    %1399 = vrot.lane.b32.xlu0 %v1376, 24
    %v1400 = vpop.permute.xlu0 %1399
    %v1403 = vsel %vm163, %v1019, %v1382
    %v1404 = vsel %vm163, %v1040, %v1384
    %v1405 = vsel %vm636, %v1403, %v1390
    %v1406 = vsel %vm636, %v1404, %v1392
    %v1407 = vsel %vm639, %v1405, %v1398
    %v1408 = vsel %vm639, %v1406, %v1400
    %v1409 = vpack.c.bf16 %v1408, %v1407
    %v1410 = vperm.slane %v895, 1
    %v1415 = vunpack.c.l.b16 %v876
    %v1416 = vunpack.c.l.b16 %v877
    %v1417 = vunpack.c.l.b16 %v878
    %v1418 = vunpack.c.l.b16 %v879
    %v1419 = vpack.c.b16 %v1416, %v1415
    %v1420 = vpack.c.b16 %v1418, %v1417
    %v1424 = vsel %vm37, %v1409, 0
    %1426 = vmatpush.bf16.msra.mxu0 0
    %1427 = vmatpush.bf16.msra.mxu0 0
    %1428 = vmatpush.bf16.msra.mxu0 0
    %1429 = vmatpush.bf16.msra.mxu0 0
    %1430 = vmatpush.bf16.msra.mxu0 0
    %1431 = vmatpush.bf16.msra.mxu0 0
    %1432 = vmatpush.bf16.msra.mxu0 %v1420
    %1433 = vmatpush.bf16.msra.mxu0 %v1419
    %1434 = vmatmul.bf16.gmra.mxu0 %v1424
    %v1435 = vpop.f32.mrf.mxu0
    %v1436 = vadd.f32 %v1410, %v1435
    %v1437 = vpop.f32.mrf.mxu0
    %v1438 = vadd.f32 %v1410, %v1437
    %1439 = vdwg.mxu0
    %v1440 = vadd.f32 %v868, %v1436
    %v1441 = vadd.f32 %v869, %v1438
    %v1442 = vsel %vm37, %v1440, 0.0
    %1443 = vadd.xlane.f32.xlu0 %v1442
    %v1444 = vpop.xlane.xlu0 %1443
    %v1445 = vsel %vm37, %v1441, 0.0
    %1446 = vadd.xlane.f32.xlu0 %v1445
    %v1447 = vpop.xlane.xlu0 %1446
    %v1448 = vmul.f32 %v1444, %v50
    %v1449 = vmul.f32 %v1447, %v50
    %v1450 = vsub.f32 %v1440, %v1448
    %v1451 = vsub.f32 %v1441, %v1449
    %v1452 = vmul.f32 %v1450, %v1450
    %v1453 = vmul.f32 %v1451, %v1451
    %v1454 = vsel %vm37, %v1452, 0.0
    %1455 = vadd.xlane.f32.xlu0 %v1454
    %v1456 = vpop.xlane.xlu0 %1455
    %v1457 = vsel %vm37, %v1453, 0.0
    %1458 = vadd.xlane.f32.xlu0 %v1457
    %v1459 = vpop.xlane.xlu0 %1458
    %v1460 = vmul.f32 %v1456, %v50
    %v1461 = vmul.f32 %v1459, %v50
    %v1462 = vadd.f32 %v1460, 1e-12
    %v1463 = vadd.f32 %v1461, 1e-12
    %v1464 = vrsqrt.pop %v1462
    %v1465 = vmul.f32 %v1464, %v1462
    %v1466 = vmul.f32 %v1465, %v1464
    %v1467 = vmul.f32 0.5, %v1466
    %v1468 = vsub.f32 1.5, %v1467
    %v1469 = vmul.f32 %v1464, %v1468
    %vm1470 = vweird.f32 %v1462
    %vm1471 = vweird.f32 %v1464
    %vm1472 = vmor %vm1470, %vm1471
    %v1473 = vsel %vm1472, %v1464, %v1469
    %v1474 = vrsqrt.pop %v1463
    %v1475 = vmul.f32 %v1474, %v1463
    %v1476 = vmul.f32 %v1475, %v1474
    %v1477 = vmul.f32 0.5, %v1476
    %v1478 = vsub.f32 1.5, %v1477
    %v1479 = vmul.f32 %v1474, %v1478
    %vm1480 = vweird.f32 %v1463
    %vm1481 = vweird.f32 %v1474
    %vm1482 = vmor %vm1480, %vm1481
    %v1483 = vsel %vm1482, %v1474, %v1479
    %v1484 = vmul.f32 %v1450, %v1473
    %v1485 = vmul.f32 %v1451, %v1483
    %v1486 = vperm.slane %v895, 3
    %v1487 = vmul.f32 %v1484, %v1486
    %v1488 = vmul.f32 %v1485, %v1486
    %v1489 = vperm.slane %v895, 4
    %v1490 = vadd.f32 %v1487, %v1489
    %v1491 = vadd.f32 %v1488, %v1489
    %v1492 = vpack.c.bf16 %v1491, %v1490
    %v1493 = vperm.slane %v895, 7
    %v1498 = vunpack.c.l.b16 %v881
    %v1499 = vunpack.c.l.b16 %v882
    %v1500 = vunpack.c.l.b16 %v883
    %v1501 = vunpack.c.l.b16 %v884
    %v1502 = vpack.c.b16 %v1499, %v1498
    %v1503 = vpack.c.b16 %v1501, %v1500
    %v1507 = vsel %vm37, %v1492, 0
    %1509 = vmatpush.bf16.msra.mxu0 0
    %1510 = vmatpush.bf16.msra.mxu0 0
    %1511 = vmatpush.bf16.msra.mxu0 0
    %1512 = vmatpush.bf16.msra.mxu0 0
    %1513 = vmatpush.bf16.msra.mxu0 0
    %1514 = vmatpush.bf16.msra.mxu0 0
    %1515 = vmatpush.bf16.msra.mxu0 %v1503
    %1516 = vmatpush.bf16.msra.mxu0 %v1502
    %1517 = vmatmul.bf16.gmra.mxu0 %v1507
    %v1518 = vpop.f32.mrf.mxu0
    %v1519 = vadd.f32 %v1493, %v1518
    %v1520 = vpop.f32.mrf.mxu0
    %v1521 = vadd.f32 %v1493, %v1520
    %1522 = vdwg.mxu0
    %v1523 = vmul.f32 %v1519, %v1519
    %v1524 = vmul.f32 %v1521, %v1521
    %v1525 = vmul.f32 %v1519, %v1523
    %v1526 = vmul.f32 %v1521, %v1524
    %v1527 = vmul.f32 %v1525, 0.044715
    %v1528 = vmul.f32 %v1526, 0.044715
    %v1529 = vadd.f32 %v1519, %v1527
    %v1530 = vadd.f32 %v1521, %v1528
    %v1531 = vmul.f32 %v1529, 0.7978846
    %v1532 = vmul.f32 %v1530, 0.7978846
    %v1533 = vtanh.pop %v1531
    %v1534 = vtanh.pop %v1532
    %v1535 = vadd.f32 %v1533, 1.0
    %v1536 = vadd.f32 %v1534, 1.0
    %v1537 = vmul.f32 %v1535, 0.5
    %v1538 = vmul.f32 %v1536, 0.5
    %v1539 = vmul.f32 %v1519, %v1537
    %v1540 = vmul.f32 %v1521, %v1538
    %v1541 = vpack.c.bf16 %v1540, %v1539
    %v1542 = vperm.slane %v895, 2
    %v1551 = vunpack.c.l.b16 %v886
    %v1552 = vunpack.c.l.b16 %v887
    %v1553 = vunpack.c.l.b16 %v888
    %v1554 = vunpack.c.l.b16 %v889
    %v1555 = vunpack.c.l.b16 %v890
    %v1556 = vunpack.c.l.b16 %v891
    %v1557 = vunpack.c.l.b16 %v892
    %v1558 = vunpack.c.l.b16 %v893
    %v1559 = vpack.c.b16 %v1552, %v1551
    %v1560 = vpack.c.b16 %v1554, %v1553
    %v1561 = vpack.c.b16 %v1556, %v1555
    %v1562 = vpack.c.b16 %v1558, %v1557
    %v1568 = vsel %vm800, %v1541, 0
    %1570 = vmatpush.bf16.msra.mxu0 0
    %1571 = vmatpush.bf16.msra.mxu0 0
    %1572 = vmatpush.bf16.msra.mxu0 0
    %1573 = vmatpush.bf16.msra.mxu0 0
    %1574 = vmatpush.bf16.msra.mxu0 %v1562
    %1575 = vmatpush.bf16.msra.mxu0 %v1561
    %1576 = vmatpush.bf16.msra.mxu0 %v1560
    %1577 = vmatpush.bf16.msra.mxu0 %v1559
    %1578 = vmatmul.bf16.gmra.mxu0 %v1568
    %v1579 = vpop.f32.mrf.mxu0
    %v1580 = vadd.f32 %v1542, %v1579
    %v1581 = vpop.f32.mrf.mxu0
    %v1582 = vadd.f32 %v1542, %v1581
    %1583 = vdwg.mxu0
    %v1584 = vadd.f32 %v1490, %v1580
    %v1585 = vadd.f32 %v1491, %v1582
    %v1586 = vsel %vm37, %v1584, 0.0
    %1587 = vadd.xlane.f32.xlu0 %v1586
    %v1588 = vpop.xlane.xlu0 %1587
    %v1589 = vsel %vm37, %v1585, 0.0
    %1590 = vadd.xlane.f32.xlu0 %v1589
    %v1591 = vpop.xlane.xlu0 %1590
    %v1592 = vmul.f32 %v1588, %v50
    %v1593 = vmul.f32 %v1591, %v50
    %v1594 = vsub.f32 %v1584, %v1592
    %v1595 = vsub.f32 %v1585, %v1593
    %v1596 = vmul.f32 %v1594, %v1594
    %v1597 = vmul.f32 %v1595, %v1595
    %v1598 = vsel %vm37, %v1596, 0.0
    %1599 = vadd.xlane.f32.xlu0 %v1598
    %v1600 = vpop.xlane.xlu0 %1599
    %v1601 = vsel %vm37, %v1597, 0.0
    %1602 = vadd.xlane.f32.xlu0 %v1601
    %v1603 = vpop.xlane.xlu0 %1602
    %v1604 = vmul.f32 %v1600, %v50
    %v1605 = vmul.f32 %v1603, %v50
    %v1606 = vadd.f32 %v1604, 1e-12
    %v1607 = vadd.f32 %v1605, 1e-12
    %v1608 = vrsqrt.pop %v1606
    %v1609 = vmul.f32 %v1608, %v1606
    %v1610 = vmul.f32 %v1609, %v1608
    %v1611 = vmul.f32 0.5, %v1610
    %v1612 = vsub.f32 1.5, %v1611
    %v1613 = vmul.f32 %v1608, %v1612
    %vm1614 = vweird.f32 %v1606
    %vm1615 = vweird.f32 %v1608
    %vm1616 = vmor %vm1614, %vm1615
    %v1617 = vsel %vm1616, %v1608, %v1613
    %v1618 = vrsqrt.pop %v1607
    %v1619 = vmul.f32 %v1618, %v1607
    %v1620 = vmul.f32 %v1619, %v1618
    %v1621 = vmul.f32 0.5, %v1620
    %v1622 = vsub.f32 1.5, %v1621
    %v1623 = vmul.f32 %v1618, %v1622
    %vm1624 = vweird.f32 %v1607
    %vm1625 = vweird.f32 %v1618
    %vm1626 = vmor %vm1624, %vm1625
    %v1627 = vsel %vm1626, %v1618, %v1623
    %v1628 = vmul.f32 %v1594, %v1617
    %v1629 = vmul.f32 %v1595, %v1627
    %v1630 = vperm.slane %v895, 5
    %v1631 = vmul.f32 %v1628, %v1630
    %v1632 = vmul.f32 %v1629, %v1630
    %v1633 = vperm.slane %v895, 6
    %v1634 = vadd.f32 %v1631, %v1633
    %v1635 = vadd.f32 %v1632, %v1633
    %v1636 = vld [vmem:[%s8] sm:$0xf]
    %v1637 = vld [vmem:[%s8 + $0x4] sm:$0xf]
    %v1638 = vld [vmem:[%s8 + $0x8] sm:$0xf]
    %v1639 = vld [vmem:[%s8 + $0xc] sm:$0xf]
    %v1640 = vpack.c.bf16 %v1634, %v1634
    %v1641 = vpack.c.bf16 %v1635, %v1635
    %v1642 = vperm.slane %v34, 2
    %v1645 = vunpack.c.l.b16 %v1640
    %v1646 = vunpack.c.l.b16 %v1641
    %v1647 = vrot.slane %v1646, 7
    %vm1648 = vcmask 1041409
    %v1649 = vsel %vm1648, %v1647, %v1645
    %v1650 = vpack.c.b16 %v1649, %v1649
    %v1655 = vunpack.c.l.b16 %v1636
    %v1656 = vunpack.c.l.b16 %v1637
    %v1657 = vunpack.c.l.b16 %v1638
    %v1658 = vunpack.c.l.b16 %v1639
    %v1659 = vpack.c.b16 %v1656, %v1655
    %v1660 = vpack.c.b16 %v1658, %v1657
    %v1664 = vsel %vm37, %v1650, 0
    %1666 = vmatpush.bf16.msra.mxu0 0
    %1667 = vmatpush.bf16.msra.mxu0 0
    %1668 = vmatpush.bf16.msra.mxu0 0
    %1669 = vmatpush.bf16.msra.mxu0 0
    %1670 = vmatpush.bf16.msra.mxu0 0
    %1671 = vmatpush.bf16.msra.mxu0 0
    %1672 = vmatpush.bf16.msra.mxu0 %v1660
    %1673 = vmatpush.bf16.msra.mxu0 %v1659
    %1674 = vmatmul.bf16.gmra.mxu0 %v1664
    %v1675 = vpop.f32.mrf.mxu0
    %v1676 = vadd.f32 %v1642, %v1675
    %v1677 = vpop.f32.mrf.mxu0
    %1678 = vdwg.mxu0
    %v1679 = vtanh.pop %v1676
    %v1680 = vpack.c.bf16 %v1679, %v1679
    %v1681 = vperm.slane %v34, 3
    %1682 = vrot.lane.b32.xlu0 %v1659, 96
    %v1683 = vpop.permute.xlu0 %1682
    %1684 = vrot.lane.b32.xlu0 %v1660, 96
    %v1685 = vpop.permute.xlu0 %1684
    %v1689 = vsel %vm37, %v1680, 0
    %1691 = vmatpush.bf16.msra.mxu0 0
    %1692 = vmatpush.bf16.msra.mxu0 0
    %1693 = vmatpush.bf16.msra.mxu0 0
    %1694 = vmatpush.bf16.msra.mxu0 0
    %1695 = vmatpush.bf16.msra.mxu0 0
    %1696 = vmatpush.bf16.msra.mxu0 0
    %1697 = vmatpush.bf16.msra.mxu0 %v1685
    %1698 = vmatpush.bf16.msra.mxu0 %v1683
    %1699 = vmatmul.bf16.gmra.mxu0 %v1689
    %v1700 = vpop.f32.mrf.mxu0
    %v1701 = vadd.f32 %v1681, %v1700
    %v1702 = vpop.f32.mrf.mxu0
    %1703 = vdwg.mxu0
    %vm1704 = vcmask 9216
    %1705 = vst.msk [vmem:[#allocation2] sm:$0x3] %vm1704, %v1701
    // Predicated region
    $region38: #{robertuito_classificator_forward.1} parent=1 // pred_check
      _
    $region39: #{robertuito_classificator_forward.1} parent=1 // pred_check_branch
      %1707 = sbr.rel (0) target = $region41
    $region40: #{robertuito_classificator_forward.1} parent=1 // pred_region
      %1709 = vsyncadd [#allocation3], 0
      %s1711 = sshll.u32 [#allocation2], 4
      %s1712 = int_to_ptr.vmem [resolvable:$true] %s1711
      %s1713 = sshll.u32 %s9, 4
      %s1714 = int_to_ptr.hbm [resolvable:$true] %s1713
      %1716 = dma.vmem_to_hbm [thread:$0]  %s1712, 32, %s1714, [#allocation3]
    $region41: #{robertuito_classificator_forward.1} parent=1 // pred_fallthru
      _
    // Predicated region
    $region42: #{robertuito_classificator_forward.1} parent=1 // pred_check
      _
    $region43: #{robertuito_classificator_forward.1} parent=1 // pred_check_branch
      %1718 = sbr.rel (0) target = $region45
    $region44: #{robertuito_classificator_forward.1} parent=1 // pred_region
      %1720 = dma.done [#allocation3], 32
    $region45: #{robertuito_classificator_forward.1} parent=1 // pred_fallthru
      _
    %1721 = vsyncpa [#allocation3], 1

</llo_original>
